<compile_context>
chip_gen: v5e
topology: v5e:2x2
jax: 0.10.0
libtpu: 0.0.40
codegen_flags: <defaults>
</compile_context>

<pallas_src>
import functools

import jax
import jax.numpy as jnp
from jax.experimental import pallas as pl
from jax.experimental.pallas import tpu as pltpu


def _round_up(x, m):
    return (x + m - 1) // m * m


def _apply_act(y, activation):
    if activation == "relu":
        return jnp.maximum(y, 0.0)
    if activation == "tanh":
        return jnp.tanh(y)
    return y


# ---------------------------------------------------------------------------
# Generation-aware hardware config (v5e/v6e: 128 MiB VMEM, 1 TC; v7x: 64 MiB,
# 2 TCs).  Falls back to the conservative v7x numbers if the query fails.
# ---------------------------------------------------------------------------
@functools.lru_cache(maxsize=None)
def _hw_config():
    vmem = 64 * 1024 * 1024
    try:
        info = pltpu.get_tpu_info()
        cap = getattr(info, "vmem_capacity_bytes", None)
        if cap:
            vmem = int(cap)
    except Exception:
        pass
    big_vmem = vmem >= 100 * 1024 * 1024
    return {
        "vmem": vmem,
        "two_cores": not big_vmem,                              # v7x generation
        "w_tile_elems": (4 if big_vmem else 2) * 1024 * 1024,   # bf16 W tile
        "tk_max": 2048 if big_vmem else 1024,
        "tn_max": 2048,
        "fused_stream_budget": (16 if big_vmem else 8) * 1024 * 1024,
        "vmem_cap": (96 if big_vmem else 40) * 1024 * 1024,
    }


def _pick_tile(dim_pad, cap):
    """Largest multiple-of-128 divisor of dim_pad that is <= cap."""
    for c in (4096, 2048, 1024, 512, 256, 128):
        if c <= cap and dim_pad % c == 0:
            return c
    return 128


# ---------------------------------------------------------------------------
# Per-layer kernels:  feat = act(x @ W + shift)  (f32)  +  bf16 activation copy.
# ---------------------------------------------------------------------------
def _linear_onek_kernel(x_ref, w_ref, s_ref, feat_ref, act_ref, *, activation):
    y = jnp.dot(x_ref[...], w_ref[...], preferred_element_type=jnp.float32)
    y = _apply_act(y + s_ref[...], activation)
    feat_ref[...] = y
    act_ref[...] = y.astype(act_ref.dtype)


def _linear_multik_kernel(x_ref, w_ref, s_ref, feat_ref, act_ref, *, activation):
    k = pl.program_id(2)
    prod = jnp.dot(x_ref[...], w_ref[...], preferred_element_type=jnp.float32)

    @pl.when(k == 0)
    def _():
        feat_ref[...] = prod            # first K step: assign (no zero-init)

    @pl.when(k > 0)
    def _():
        feat_ref[...] += prod           # accumulate directly in the f32 output

    @pl.when(k == pl.num_programs(2) - 1)
    def _():
        y = _apply_act(feat_ref[...] + s_ref[...], activation)
        feat_ref[...] = y
        act_ref[...] = y.astype(act_ref.dtype)


def _fused_linear_prepared(xp, wp, sp, activation, *,
                           tm_max=None, tn_max=None, tk_max=None):
    """act(xp @ wp + sp) on pre-padded operands.

    xp: (M, Kp) bf16, wp: (Kp, Np) bf16, sp: (1, Np) f32, Kp/Np multiples of
    128.  Returns (feat_f32, act_bf16), both (M, Np) (padded width).
    """
    hw = _hw_config()
    tm_max = 512 if tm_max is None else tm_max
    tn_max = hw["tn_max"] if tn_max is None else tn_max
    tk_max = hw["tk_max"] if tk_max is None else tk_max

    M, Kp = xp.shape
    Kw, Np = wp.shape
    assert Kp == Kw and sp.shape == (1, Np)

    # ---- batch tiling (only needed for big batches) ----
    if M <= tm_max:
        tm, m_pad = M, M
    else:
        tm = tm_max
        m_pad = _round_up(M, tm)
        if m_pad != M:
            xp = jnp.pad(xp, ((0, m_pad - M), (0, 0)))
    nm = m_pad // tm

    # ---- N tile: largest 128-multiple divisor; prefer >=2 blocks only on
    #      the 2-TensorCore generation (v7x) ----
    tn = _pick_tile(Np, tn_max)
    if hw["two_cores"] and Np // tn < 2 and tn > 128:
        tn = _pick_tile(Np, tn // 2)
    nn = Np // tn

    # ---- K tile: keep the double-buffered bf16 W tile inside budget ----
    tk_cap = max(128, min(tk_max, hw["w_tile_elems"] // tn))
    if Kp <= tk_cap:
        tk, nk = Kp, 1
    else:
        tk = _pick_tile(Kp, tk_cap)
        nk = Kp // tk

    # Working-set estimate (double-buffered inputs/outputs); raise the scoped
    # VMEM limit only when needed, with a generation-aware cap.
    est = 2 * (tm * tk * 2 + tk * tn * 2 + tn * 4 + tm * tn * 4 + tm * tn * 2)
    cp = {}
    if est > 12 * 1024 * 1024:
        cp["vmem_limit_bytes"] = min(int(est * 1.5), hw["vmem_cap"])

    out_shape = (jax.ShapeDtypeStruct((m_pad, Np), jnp.float32),
                 jax.ShapeDtypeStruct((m_pad, Np), jnp.bfloat16))

    if nk == 1:
        grid = (nm, nn)
        kernel = functools.partial(_linear_onek_kernel, activation=activation)
        in_specs = [
            pl.BlockSpec((tm, Kp), lambda i, j: (i, 0)),
            pl.BlockSpec((Kp, tn), lambda i, j: (0, j)),
            pl.BlockSpec((1, tn), lambda i, j: (0, j)),
        ]
        out_specs = [pl.BlockSpec((tm, tn), lambda i, j: (i, j)),
                     pl.BlockSpec((tm, tn), lambda i, j: (i, j))]
        dim_sem = ("parallel", "parallel")
    else:
        grid = (nm, nn, nk)                          # K innermost (reduction)
        kernel = functools.partial(_linear_multik_kernel, activation=activation)
        in_specs = [
            pl.BlockSpec((tm, tk), lambda i, j, k: (i, k)),
            pl.BlockSpec((tk, tn), lambda i, j, k: (k, j)),
            pl.BlockSpec((1, tn), lambda i, j, k: (0, j)),
        ]
        out_specs = [pl.BlockSpec((tm, tn), lambda i, j, k: (i, j)),
                     pl.BlockSpec((tm, tn), lambda i, j, k: (i, j))]
        dim_sem = ("parallel", "parallel", "arbitrary")

    feat, act = pl.pallas_call(
        kernel,
        out_shape=out_shape,
        grid_spec=pltpu.PrefetchScalarGridSpec(
            num_scalar_prefetch=0, grid=grid,
            in_specs=in_specs, out_specs=out_specs),
        compiler_params=pltpu.CompilerParams(dimension_semantics=dim_sem, **cp),
    )(xp, wp, sp)
    if m_pad != M:
        feat, act = feat[:M], act[:M]
    return feat, act


def fused_linear(x, w, shift, *, activation="none", **tile_kwargs):
    """Convenience wrapper for un-prepared f32 operands (tests / one-offs)."""
    M, K = x.shape
    Kw, N = w.shape
    assert K == Kw and shift.shape == (N,)
    Kp, Np = _round_up(K, 128), _round_up(N, 128)
    xp = x.astype(jnp.bfloat16)
    if Kp != K:
        xp = jnp.pad(xp, ((0, 0), (0, Kp - K)))
    wp, sp = w, shift
    if Kp != K or Np != N:
        wp = jnp.pad(wp, ((0, Kp - K), (0, Np - N)))
        sp = jnp.pad(sp, (0, Np - N))
    wp = wp.astype(jnp.bfloat16)
    sp = sp.reshape(1, Np).astype(jnp.float32)
    feat, _ = _fused_linear_prepared(xp, wp, sp, activation, **tile_kwargs)
    return feat[:, :N] if Np != N else feat


# ---------------------------------------------------------------------------
# Whole-network fused kernel.  One grid axis streams W1 (N1 tiles) and W2
# (matching K tiles) through double-buffered VMEM while layer-1 compute runs;
# layer-2 partial sums live in a resident f32 accumulator; layers 3/4 run on
# the last step with their (small) weights resident.
# ---------------------------------------------------------------------------
def _txtnet_fused_kernel(x_ref, w1_ref, t1_ref, w2_ref, t2_ref,
                         w3_ref, t3_ref, w4_ref, t4_ref,
                         f1_ref, f2_ref, f3_ref, code_ref, acc2_ref):
    j = pl.program_id(0)

    # Layer 1 (Linear + BN(eval) + ReLU), one N1 tile per grid step.
    h1 = jnp.dot(x_ref[...], w1_ref[...], preferred_element_type=jnp.float32)
    h1 = jnp.maximum(h1 + t1_ref[...], 0.0)
    f1_ref[...] = h1

    # Layer 2 partial product for this K chunk (K2 == N1).
    prod = jnp.dot(h1.astype(jnp.bfloat16), w2_ref[...],
                   preferred_element_type=jnp.float32)

    @pl.when(j == 0)
    def _():
        acc2_ref[...] = prod

    @pl.when(j > 0)
    def _():
        acc2_ref[...] += prod

    @pl.when(j == pl.num_programs(0) - 1)
    def _():
        # Layer 2 epilogue (BN folded) + ReLU.
        h2 = jnp.maximum(acc2_ref[...] + t2_ref[...], 0.0)
        f2_ref[...] = h2
        # Layer 3: Linear + ReLU (Dropout = identity in eval).
        h3 = jnp.dot(h2.astype(jnp.bfloat16), w3_ref[...],
                     preferred_element_type=jnp.float32)
        h3 = jnp.maximum(h3 + t3_ref[...], 0.0)
        f3_ref[...] = h3
        # Hash layer: Linear + tanh.
        c = jnp.dot(h3.astype(jnp.bfloat16), w4_ref[...],
                    preferred_element_type=jnp.float32)
        code_ref[...] = jnp.tanh(c + t4_ref[...])


def _plan_fused(M, dims_pad):
    """Pick the layer-1 N tile and estimate the fused kernel's VMEM use."""
    hw = _hw_config()
    K0p, N1p, N2p, N3p, N4p = dims_pad
    tn1 = 128
    for c in (2048, 1024, 512, 256, 128):
        if N1p % c == 0 and 4 * c * (K0p + N2p) <= hw["fused_stream_budget"]:
            tn1 = c
            break
    est = (4 * M * K0p                        # x (bf16, x2 buffers)
           + 4 * tn1 * (K0p + N2p)            # streamed W1/W2 blocks (bf16, x2)
           + 4 * (N2p * N3p + N3p * N4p)      # resident W3/W4 (bf16, x2)
           + 8 * (tn1 + N2p + N3p + N4p)      # shifts (f32, x2)
           + 8 * M * (tn1 + N2p + N3p + N4p)  # outputs (f32, x2)
           + 4 * M * N2p)                     # layer-2 accumulator scratch
    return tn1, est


def _fused_whole_net(xp, layers, dims_pad, tn1, est):
    hw = _hw_config()
    M = xp.shape[0]
    K0p, N1p, N2p, N3p, N4p = dims_pad
    nj = N1p // tn1

    cp = {}
    if est > 12 * 1024 * 1024:
        cp["vmem_limit_bytes"] = min(max(int(est * 1.4), 16 * 1024 * 1024),
                                     hw["vmem_cap"])

    w1, t1 = layers[0]["w"], layers[0]["shift"]
    w2, t2 = layers[1]["w"], layers[1]["shift"]
    w3, t3 = layers[2]["w"], layers[2]["shift"]
    w4, t4 = layers[3]["w"], layers[3]["shift"]

    in_specs = [
        pl.BlockSpec((M, K0p), lambda j: (0, 0)),     # x           (resident)
        pl.BlockSpec((K0p, tn1), lambda j: (0, j)),   # W1 N-tile   (streamed)
        pl.BlockSpec((1, tn1), lambda j: (0, j)),     # t1 tile
        pl.BlockSpec((tn1, N2p), lambda j: (j, 0)),   # W2 K-tile   (streamed)
        pl.BlockSpec((1, N2p), lambda j: (0, 0)),     # t2          (resident)
        pl.BlockSpec((N2p, N3p), lambda j: (0, 0)),   # W3          (resident)
        pl.BlockSpec((1, N3p), lambda j: (0, 0)),     # t3
        pl.BlockSpec((N3p, N4p), lambda j: (0, 0)),   # W4          (resident)
        pl.BlockSpec((1, N4p), lambda j: (0, 0)),     # t4
    ]
    out_specs = [
        pl.BlockSpec((M, tn1), lambda j: (0, j)),     # feat1 tile per step
        pl.BlockSpec((M, N2p), lambda j: (0, 0)),     # feat2 (last step only)
        pl.BlockSpec((M, N3p), lambda j: (0, 0)),     # feat3
        pl.BlockSpec((M, N4p), lambda j: (0, 0)),     # code
    ]
    out_shape = (jax.ShapeDtypeStruct((M, N1p), jnp.float32),
                 jax.ShapeDtypeStruct((M, N2p), jnp.float32),
                 jax.ShapeDtypeStruct((M, N3p), jnp.float32),
                 jax.ShapeDtypeStruct((M, N4p), jnp.float32))

    return pl.pallas_call(
        _txtnet_fused_kernel,
        out_shape=out_shape,
        grid_spec=pltpu.PrefetchScalarGridSpec(
            num_scalar_prefetch=0,
            grid=(nj,),
            in_specs=in_specs,
            out_specs=out_specs,
            scratch_shapes=[pltpu.VMEM((M, N2p), jnp.float32)]),
        compiler_params=pltpu.CompilerParams(
            dimension_semantics=("arbitrary",), **cp),
    )(xp, w1, t1, w2, t2, w3, t3, w4, t4)


# ---------------------------------------------------------------------------
# Parameter construction (synthetic) + one-time kernel-ready preparation.
# ---------------------------------------------------------------------------
def _make_linear_params(key, in_dim, out_dim):
    kw, kb = jax.random.split(key)
    lim = float(1.0 / (in_dim ** 0.5))
    w = jax.random.uniform(kw, (in_dim, out_dim), jnp.float32, -lim, lim)
    b = jax.random.uniform(kb, (out_dim,), jnp.float32, -lim, lim)
    return w, b


def _make_bn_params(key, dim):
    kg, kb, km, kv = jax.random.split(key, 4)
    gamma = jax.random.uniform(kg, (dim,), jnp.float32, 0.5, 1.5)
    beta = jax.random.uniform(kb, (dim,), jnp.float32, -0.5, 0.5)
    mean = jax.random.uniform(km, (dim,), jnp.float32, -0.5, 0.5)
    var = jax.random.uniform(kv, (dim,), jnp.float32, 0.5, 1.5)
    return gamma, beta, mean, var


def init_txtnet_params(key, text_length, code_len, h1, h2, h3, eps=1e-5):
    """Folded f32 parameters: every layer becomes y = act(x @ w + shift)."""
    keys = jax.random.split(key, 6)
    w1, b1 = _make_linear_params(keys[0], text_length, h1)
    g1, be1, m1, v1 = _make_bn_params(keys[1], h1)
    w2, b2 = _make_linear_params(keys[2], h1, h2)
    g2, be2, m2, v2 = _make_bn_params(keys[3], h2)
    w3, b3 = _make_linear_params(keys[4], h2, h3)
    w4, b4 = _make_linear_params(keys[5], h3, code_len)

    def fold(w, b, gamma, beta, mean, var):
        inv = gamma / jnp.sqrt(var + eps)            # eval-mode BN scale
        return w * inv[None, :], (b - mean) * inv + beta

    w1f, t1 = fold(w1, b1, g1, be1, m1, v1)
    w2f, t2 = fold(w2, b2, g2, be2, m2, v2)
    return {
        "layer1": {"w": w1f, "shift": t1},
        "layer2": {"w": w2f, "shift": t2},
        "layer3": {"w": w3, "shift": b3},
        "hash":   {"w": w4, "shift": b4},
    }


def prepare_params(folded):
    """One-time conversion to kernel-ready layout (NOT per call): pad every
    weight to (Kpad, Npad) multiples of 128, cast to bfloat16, and store the
    shifts as (1, Npad) f32 rows ready for DMA."""
    order = ("layer1", "layer2", "layer3", "hash")
    ws = [folded[k]["w"] for k in order]
    ss = [folded[k]["shift"] for k in order]
    dims = tuple(int(d) for d in
                 (ws[0].shape[0],) + tuple(w.shape[1] for w in ws))
    dims_pad = tuple(_round_up(d, 128) for d in dims)
    layers = []
    for i in range(4):
        kin, kout = dims[i], dims[i + 1]
        kin_p, kout_p = dims_pad[i], dims_pad[i + 1]
        w, s = ws[i], ss[i]
        if (kin_p, kout_p) != (kin, kout):
            w = jnp.pad(w, ((0, kin_p - kin), (0, kout_p - kout)))
            s = jnp.pad(s, (0, kout_p - kout))
        layers.append({"w": w.astype(jnp.bfloat16),
                       "shift": s.reshape(1, kout_p).astype(jnp.float32)})
    return {"layers": layers}, dims


# ---------------------------------------------------------------------------
# TxtNet_T forward (inference semantics): returns (feat1, feat2, feat3, code).
# ---------------------------------------------------------------------------
_ACTS = ("relu", "relu", "relu", "tanh")


@functools.partial(jax.jit,
                   static_argnames=("dims", "force_per_layer", "force_fused"))
def txtnet_t_forward(params, x, *, dims, force_per_layer=False,
                     force_fused=False):
    hw = _hw_config()
    dims_pad = tuple(_round_up(d, 128) for d in dims)
    M = x.shape[0]

    # Only the small input activation is padded / cast per call; all weights
    # were converted once in prepare_params.
    xp = x.astype(jnp.bfloat16)
    if dims_pad[0] != dims[0]:
        xp = jnp.pad(xp, ((0, 0), (0, dims_pad[0] - dims[0])))

    layers = params["layers"]
    tn1, est = _plan_fused(M, dims_pad)
    use_fused = force_fused or (not force_per_layer and M <= 512
                                and est <= int(0.6 * hw["vmem"]))

    if use_fused:
        feats = _fused_whole_net(xp, layers, dims_pad, tn1, est)
    else:
        feats, h = [], xp
        for li in range(4):
            feat, h = _fused_linear_prepared(
                h, layers[li]["w"], layers[li]["shift"], _ACTS[li])
            feats.append(feat)

    # Slice padded widths back to the module's logical widths.  (Downstream
    # consumers that prefer lane-dense buffers can use the padded arrays.)
    return tuple(f[:, :n] if f.shape[1] != n else f
                 for f, n in zip(feats, dims[1:]))


# ---------------------------------------------------------------------------
# Pure-JAX (f32) reference on the folded parameters.
# ---------------------------------------------------------------------------
def txtnet_t_reference(folded, x):
    def layer(h, p, act):
        return _apply_act(h @ p["w"] + p["shift"], act)
    f1 = layer(x, folded["layer1"], "relu")
    f2 = layer(f1, folded["layer2"], "relu")
    f3 = layer(f2, folded["layer3"], "relu")
    code = layer(f3, folded["hash"], "tanh")
    return f1, f2, f3, code


if __name__ == "__main__":
    # Small, structure-consistent shapes (original: 1386 -> 4096 -> 2048 -> 512 -> 64).
    batch = 8
    text_length = 256
    h1, h2, h3 = 512, 256, 128
    code_len = 64

    key = jax.random.PRNGKey(0)
    k_params, k_x = jax.random.split(key)
    folded = init_txtnet_params(k_params, text_length, code_len, h1, h2, h3)
    prepared, dims = prepare_params(folded)          # one-time weight prep
    x = jax.random.normal(k_x, (batch, text_length), jnp.float32)

    # Whole-network fused path (single pallas_call with streamed W1/W2).
    f1, f2, f3, code = jax.block_until_ready(
        txtnet_t_forward(prepared, x, dims=dims, force_fused=True))
    # Per-layer streaming path (used at large batch / very large models).
    g1, g2, g3, gcode = jax.block_until_ready(
        txtnet_t_forward(prepared, x, dims=dims, force_per_layer=True))

    r1, r2, r3, rc = txtnet_t_reference(folded, x)

    assert f1.shape == (batch, h1) and f2.shape == (batch, h2)
    assert f3.shape == (batch, h3) and code.shape == (batch, code_len)
    assert g1.shape == (batch, h1) and gcode.shape == (batch, code_len)

    def check(a, b, atol=2e-2, rtol=2e-2):
        assert jnp.allclose(a, b, atol=atol, rtol=rtol), \
            float(jnp.max(jnp.abs(a - b)))

    for a, b in ((f1, r1), (f2, r2), (f3, r3), (code, rc),
                 (g1, r1), (g2, r2), (g3, r3), (gcode, rc)):
        check(a, b)

    # Exercise the M-tiled, multi-K accumulating per-layer kernel directly
    # (tiny tile caps force batch tiling and a 4-step K reduction).
    kk = jax.random.split(k_x)
    xx = jax.random.normal(kk[0], (16, 512), jnp.float32)
    ww = jax.random.uniform(kk[1], (512, 200), jnp.float32, -0.05, 0.05)
    ss = jax.random.uniform(jax.random.PRNGKey(7), (200,), jnp.float32,
                            -0.1, 0.1)
    yy = jax.block_until_ready(
        fused_linear(xx, ww, ss, activation="relu", tm_max=8, tk_max=128))
    check(yy, jnp.maximum(xx @ ww + ss, 0.0))

    print("KERNEL_OK")
</pallas_src>

<mosaic_0001>
module attributes {stable_mosaic.version = 11 : i64} {
  func.func @_txtnet_fused_kernel(%arg0: i32, %arg1: memref<8x256xbf16, #tpu.memory_space<vmem>>, %arg2: memref<256x512xbf16, #tpu.memory_space<vmem>>, %arg3: memref<1x512xf32, #tpu.memory_space<vmem>>, %arg4: memref<512x256xbf16, #tpu.memory_space<vmem>>, %arg5: memref<1x256xf32, #tpu.memory_space<vmem>>, %arg6: memref<256x128xbf16, #tpu.memory_space<vmem>>, %arg7: memref<1x128xf32, #tpu.memory_space<vmem>>, %arg8: memref<128x128xbf16, #tpu.memory_space<vmem>>, %arg9: memref<1x128xf32, #tpu.memory_space<vmem>>, %arg10: memref<8x512xf32, #tpu.memory_space<vmem>>, %arg11: memref<8x256xf32, #tpu.memory_space<vmem>>, %arg12: memref<8x128xf32, #tpu.memory_space<vmem>>, %arg13: memref<8x128xf32, #tpu.memory_space<vmem>>, %arg14: memref<8x256xf32, #tpu.memory_space<vmem>>) attributes {dimension_semantics = [#tpu.dimension_semantics<arbitrary>], iteration_bounds = array<i64: 1>, scalar_prefetch = 0 : i64, scratch_operands = 1 : i64, tpu.core_type = #tpu.core_type<tc>, window_params = [{pipeline_mode = #tpu.pipeline_mode<synchronous>, transform_indices = @transform_0, window_bounds = array<i64: 8, 256>}, {transform_indices = @transform_1, window_bounds = array<i64: 256, 512>}, {transform_indices = @transform_2, window_bounds = array<i64: 1, 512>}, {transform_indices = @transform_3, window_bounds = array<i64: 512, 256>}, {pipeline_mode = #tpu.pipeline_mode<synchronous>, transform_indices = @transform_4, window_bounds = array<i64: 1, 256>}, {pipeline_mode = #tpu.pipeline_mode<synchronous>, transform_indices = @transform_5, window_bounds = array<i64: 256, 128>}, {pipeline_mode = #tpu.pipeline_mode<synchronous>, transform_indices = @transform_6, window_bounds = array<i64: 1, 128>}, {pipeline_mode = #tpu.pipeline_mode<synchronous>, transform_indices = @transform_7, window_bounds = array<i64: 128, 128>}, {pipeline_mode = #tpu.pipeline_mode<synchronous>, transform_indices = @transform_8, window_bounds = array<i64: 1, 128>}, {transform_indices = @transform_9, window_bounds = array<i64: 8, 512>}, {pipeline_mode = #tpu.pipeline_mode<synchronous>, transform_indices = @transform_10, window_bounds = array<i64: 8, 256>}, {pipeline_mode = #tpu.pipeline_mode<synchronous>, transform_indices = @transform_11, window_bounds = array<i64: 8, 128>}, {pipeline_mode = #tpu.pipeline_mode<synchronous>, transform_indices = @transform_12, window_bounds = array<i64: 8, 128>}]} {
    %c0 = arith.constant 0 : index
    %c0_0 = arith.constant 0 : index
    %0 = vector.load %arg1[%c0, %c0_0] : memref<8x256xbf16, #tpu.memory_space<vmem>>, vector<8x256xbf16>
    %c0_1 = arith.constant 0 : index
    %c0_2 = arith.constant 0 : index
    %1 = vector.load %arg2[%c0_1, %c0_2] : memref<256x512xbf16, #tpu.memory_space<vmem>>, vector<256x512xbf16>
    %cst = arith.constant dense<0.000000e+00> : vector<8x512xf32>
    %2 = tpu.matmul %0, %1, %cst {dimension_numbers = #tpu.dot_dimension_numbers<[1], [0], [0], [1], [0, 0, 1, 1], [], []>} : vector<8x256xbf16>, vector<256x512xbf16>, vector<8x512xf32> -> vector<8x512xf32>
    %c0_3 = arith.constant 0 : index
    %c0_4 = arith.constant 0 : index
    %3 = vector.load %arg3[%c0_3, %c0_4] : memref<1x512xf32, #tpu.memory_space<vmem>>, vector<1x512xf32>
    %4 = vector.broadcast %3 : vector<1x512xf32> to vector<8x512xf32>
    %5 = arith.addf %2, %4 : vector<8x512xf32>
    %cst_5 = arith.constant 0.000000e+00 : f32
    %6 = vector.broadcast %cst_5 : f32 to vector<8x512xf32>
    %7 = arith.maximumf %5, %6 : vector<8x512xf32>
    %c0_6 = arith.constant 0 : index
    %c0_7 = arith.constant 0 : index
    %8 = vector.load %arg10[%c0_6, %c0_7] : memref<8x512xf32, #tpu.memory_space<vmem>>, vector<8x512xf32>
    tpu.vector_store %arg10[%c0_6, %c0_7], %7 {strides = array<i32>} : memref<8x512xf32, #tpu.memory_space<vmem>>, vector<8x512xf32>,
    %9 = arith.truncf %7 : vector<8x512xf32> to vector<8x512xbf16>
    %c0_8 = arith.constant 0 : index
    %c0_9 = arith.constant 0 : index
    %10 = vector.load %arg4[%c0_8, %c0_9] : memref<512x256xbf16, #tpu.memory_space<vmem>>, vector<512x256xbf16>
    %cst_10 = arith.constant dense<0.000000e+00> : vector<8x256xf32>
    %11 = tpu.matmul %9, %10, %cst_10 {dimension_numbers = #tpu.dot_dimension_numbers<[1], [0], [0], [1], [0, 0, 1, 1], [], []>} : vector<8x512xbf16>, vector<512x256xbf16>, vector<8x256xf32> -> vector<8x256xf32>
    %c0_i32 = arith.constant 0 : i32
    %12 = arith.cmpi eq, %arg0, %c0_i32 : i32
    %13 = arith.extui %12 : i1 to i32
    %c0_i32_11 = arith.constant 0 : i32
    %14 = arith.cmpi ne, %13, %c0_i32_11 : i32
    scf.if %14 {
      %c0_16 = arith.constant 0 : index
      %c0_17 = arith.constant 0 : index
      %21 = vector.load %arg14[%c0_16, %c0_17] : memref<8x256xf32, #tpu.memory_space<vmem>>, vector<8x256xf32>
      tpu.vector_store %arg14[%c0_16, %c0_17], %11 {strides = array<i32>} : memref<8x256xf32, #tpu.memory_space<vmem>>, vector<8x256xf32>,
    } else {
    }
    %c0_i32_12 = arith.constant 0 : i32
    %15 = arith.cmpi sgt, %arg0, %c0_i32_12 : i32
    %16 = arith.extui %15 : i1 to i32
    %c0_i32_13 = arith.constant 0 : i32
    %17 = arith.cmpi ne, %16, %c0_i32_13 : i32
    scf.if %17 {
      %c0_16 = arith.constant 0 : index
      %c0_17 = arith.constant 0 : index
      %21 = vector.load %arg14[%c0_16, %c0_17] : memref<8x256xf32, #tpu.memory_space<vmem>>, vector<8x256xf32>
      %22 = arith.addf %21, %11 : vector<8x256xf32>
      %c0_18 = arith.constant 0 : index
      %c0_19 = arith.constant 0 : index
      %23 = vector.load %arg14[%c0_18, %c0_19] : memref<8x256xf32, #tpu.memory_space<vmem>>, vector<8x256xf32>
      tpu.vector_store %arg14[%c0_18, %c0_19], %22 {strides = array<i32>} : memref<8x256xf32, #tpu.memory_space<vmem>>, vector<8x256xf32>,
    } else {
    }
    %c0_i32_14 = arith.constant 0 : i32
    %18 = arith.cmpi eq, %arg0, %c0_i32_14 : i32
    %19 = arith.extui %18 : i1 to i32
    %c0_i32_15 = arith.constant 0 : i32
    %20 = arith.cmpi ne, %19, %c0_i32_15 : i32
    scf.if %20 {
      %c0_16 = arith.constant 0 : index
      %c0_17 = arith.constant 0 : index
      %21 = vector.load %arg14[%c0_16, %c0_17] : memref<8x256xf32, #tpu.memory_space<vmem>>, vector<8x256xf32>
      %c0_18 = arith.constant 0 : index
      %c0_19 = arith.constant 0 : index
      %22 = vector.load %arg5[%c0_18, %c0_19] : memref<1x256xf32, #tpu.memory_space<vmem>>, vector<1x256xf32>
      %23 = vector.broadcast %22 : vector<1x256xf32> to vector<8x256xf32>
      %24 = arith.addf %21, %23 : vector<8x256xf32>
      %cst_20 = arith.constant 0.000000e+00 : f32
      %25 = vector.broadcast %cst_20 : f32 to vector<8x256xf32>
      %26 = arith.maximumf %24, %25 : vector<8x256xf32>
      %c0_21 = arith.constant 0 : index
      %c0_22 = arith.constant 0 : index
      %27 = vector.load %arg11[%c0_21, %c0_22] : memref<8x256xf32, #tpu.memory_space<vmem>>, vector<8x256xf32>
      tpu.vector_store %arg11[%c0_21, %c0_22], %26 {strides = array<i32>} : memref<8x256xf32, #tpu.memory_space<vmem>>, vector<8x256xf32>,
      %28 = arith.truncf %26 : vector<8x256xf32> to vector<8x256xbf16>
      %c0_23 = arith.constant 0 : index
      %c0_24 = arith.constant 0 : index
      %29 = vector.load %arg6[%c0_23, %c0_24] : memref<256x128xbf16, #tpu.memory_space<vmem>>, vector<256x128xbf16>
      %cst_25 = arith.constant dense<0.000000e+00> : vector<8x128xf32>
      %30 = tpu.matmul %28, %29, %cst_25 {dimension_numbers = #tpu.dot_dimension_numbers<[1], [0], [0], [1], [0, 0, 1, 1], [], []>} : vector<8x256xbf16>, vector<256x128xbf16>, vector<8x128xf32> -> vector<8x128xf32>
      %c0_26 = arith.constant 0 : index
      %c0_27 = arith.constant 0 : index
      %31 = vector.load %arg7[%c0_26, %c0_27] : memref<1x128xf32, #tpu.memory_space<vmem>>, vector<1x128xf32>
      %32 = vector.broadcast %31 : vector<1x128xf32> to vector<8x128xf32>
      %33 = arith.addf %30, %32 : vector<8x128xf32>
      %cst_28 = arith.constant 0.000000e+00 : f32
      %34 = vector.broadcast %cst_28 : f32 to vector<8x128xf32>
      %35 = arith.maximumf %33, %34 : vector<8x128xf32>
      %c0_29 = arith.constant 0 : index
      %c0_30 = arith.constant 0 : index
      %36 = vector.load %arg12[%c0_29, %c0_30] : memref<8x128xf32, #tpu.memory_space<vmem>>, vector<8x128xf32>
      tpu.vector_store %arg12[%c0_29, %c0_30], %35 {strides = array<i32>} : memref<8x128xf32, #tpu.memory_space<vmem>>, vector<8x128xf32>,
      %37 = arith.truncf %35 : vector<8x128xf32> to vector<8x128xbf16>
      %c0_31 = arith.constant 0 : index
      %c0_32 = arith.constant 0 : index
      %38 = vector.load %arg8[%c0_31, %c0_32] : memref<128x128xbf16, #tpu.memory_space<vmem>>, vector<128x128xbf16>
      %cst_33 = arith.constant dense<0.000000e+00> : vector<8x128xf32>
      %39 = tpu.matmul %37, %38, %cst_33 {dimension_numbers = #tpu.dot_dimension_numbers<[1], [0], [0], [1], [0, 0, 1, 1], [], []>} : vector<8x128xbf16>, vector<128x128xbf16>, vector<8x128xf32> -> vector<8x128xf32>
      %c0_34 = arith.constant 0 : index
      %c0_35 = arith.constant 0 : index
      %40 = vector.load %arg9[%c0_34, %c0_35] : memref<1x128xf32, #tpu.memory_space<vmem>>, vector<1x128xf32>
      %41 = vector.broadcast %40 : vector<1x128xf32> to vector<8x128xf32>
      %42 = arith.addf %39, %41 : vector<8x128xf32>
      %43 = math.tanh %42 : vector<8x128xf32>
      %c0_36 = arith.constant 0 : index
      %c0_37 = arith.constant 0 : index
      %44 = vector.load %arg13[%c0_36, %c0_37] : memref<8x128xf32, #tpu.memory_space<vmem>>, vector<8x128xf32>
      tpu.vector_store %arg13[%c0_36, %c0_37], %43 {strides = array<i32>} : memref<8x128xf32, #tpu.memory_space<vmem>>, vector<8x128xf32>,
    } else {
    }
    return
  }
  func.func @transform_0(%arg0: i32) -> (i32, i32) {
    %c0_i32 = arith.constant 0 : i32
    %c0_i32_0 = arith.constant 0 : i32
    %c0_i32_1 = arith.constant 0 : i32
    return %c0_i32, %c0_i32_0 : i32, i32
  }
  func.func @transform_1(%arg0: i32) -> (i32, i32) {
    %c0_i32 = arith.constant 0 : i32
    %c0_i32_0 = arith.constant 0 : i32
    return %c0_i32, %arg0 : i32, i32
  }
  func.func @transform_2(%arg0: i32) -> (i32, i32) {
    %c0_i32 = arith.constant 0 : i32
    %c0_i32_0 = arith.constant 0 : i32
    return %c0_i32, %arg0 : i32, i32
  }
  func.func @transform_3(%arg0: i32) -> (i32, i32) {
    %c0_i32 = arith.constant 0 : i32
    %c0_i32_0 = arith.constant 0 : i32
    return %arg0, %c0_i32 : i32, i32
  }
  func.func @transform_4(%arg0: i32) -> (i32, i32) {
    %c0_i32 = arith.constant 0 : i32
    %c0_i32_0 = arith.constant 0 : i32
    %c0_i32_1 = arith.constant 0 : i32
    return %c0_i32, %c0_i32_0 : i32, i32
  }
  func.func @transform_5(%arg0: i32) -> (i32, i32) {
    %c0_i32 = arith.constant 0 : i32
    %c0_i32_0 = arith.constant 0 : i32
    %c0_i32_1 = arith.constant 0 : i32
    return %c0_i32, %c0_i32_0 : i32, i32
  }
  func.func @transform_6(%arg0: i32) -> (i32, i32) {
    %c0_i32 = arith.constant 0 : i32
    %c0_i32_0 = arith.constant 0 : i32
    %c0_i32_1 = arith.constant 0 : i32
    return %c0_i32, %c0_i32_0 : i32, i32
  }
  func.func @transform_7(%arg0: i32) -> (i32, i32) {
    %c0_i32 = arith.constant 0 : i32
    %c0_i32_0 = arith.constant 0 : i32
    %c0_i32_1 = arith.constant 0 : i32
    return %c0_i32, %c0_i32_0 : i32, i32
  }
  func.func @transform_8(%arg0: i32) -> (i32, i32) {
    %c0_i32 = arith.constant 0 : i32
    %c0_i32_0 = arith.constant 0 : i32
    %c0_i32_1 = arith.constant 0 : i32
    return %c0_i32, %c0_i32_0 : i32, i32
  }
  func.func @transform_9(%arg0: i32) -> (i32, i32) {
    %c0_i32 = arith.constant 0 : i32
    %c0_i32_0 = arith.constant 0 : i32
    return %c0_i32, %arg0 : i32, i32
  }
  func.func @transform_10(%arg0: i32) -> (i32, i32) {
    %c0_i32 = arith.constant 0 : i32
    %c0_i32_0 = arith.constant 0 : i32
    %c0_i32_1 = arith.constant 0 : i32
    return %c0_i32, %c0_i32_0 : i32, i32
  }
  func.func @transform_11(%arg0: i32) -> (i32, i32) {
    %c0_i32 = arith.constant 0 : i32
    %c0_i32_0 = arith.constant 0 : i32
    %c0_i32_1 = arith.constant 0 : i32
    return %c0_i32, %c0_i32_0 : i32, i32
  }
  func.func @transform_12(%arg0: i32) -> (i32, i32) {
    %c0_i32 = arith.constant 0 : i32
    %c0_i32_0 = arith.constant 0 : i32
    %c0_i32_1 = arith.constant 0 : i32
    return %c0_i32, %c0_i32_0 : i32, i32
  }
}

</mosaic_0001>

<llo_original>
// kernel: txtnet_t_forward.1
$region0: #{txtnet_t_forward.1}
  #allocation0 [shape = 'u32[]', space=smem, size = 0x4, offset = 0x4, fixed_abs, tag = 'smem constant byte address 0x4 - core index']
  #allocation1 [shape = 'u32[72,128]{1,0:T(1,128)}', space=vmem, size = 0x9000, scoped, tag = 'internal scratch']
  #allocation2 [shape = 'f32[8,256]{1,0:T(8,128)}', space=vmem, size = 0x2000, scoped, tag = 'scratch operand']
  %s0 = inlined_call_operand.vmem [shape: bf16[8,256], index: 0, kind: input, shape index: {}]
  %s1 = inlined_call_operand.hbm [shape: bf16[256,512], index: 1, kind: input, shape index: {}]
  %s2 = inlined_call_operand.vmem [shape: f32[1,512], index: 2, kind: input, shape index: {}]
  %s3 = inlined_call_operand.hbm [shape: bf16[512,256], index: 3, kind: input, shape index: {}]
  %s4 = inlined_call_operand.vmem [shape: f32[1,256], index: 4, kind: input, shape index: {}]
  %s5 = inlined_call_operand.hbm [shape: bf16[256,128], index: 5, kind: input, shape index: {}]
  %s6 = inlined_call_operand.vmem [shape: f32[1,128], index: 6, kind: input, shape index: {}]
  %s7 = inlined_call_operand.hbm [shape: bf16[128,128], index: 7, kind: input, shape index: {}]
  %s8 = inlined_call_operand.vmem [shape: f32[1,128], index: 8, kind: input, shape index: {}]
  %s9 = inlined_call_operand.hbm [shape: f32[8,512], index: 9, kind: output, shape index: {0}]
  %s10 = inlined_call_operand.hbm [shape: f32[8,256], index: 10, kind: output, shape index: {1}]
  %s11 = inlined_call_operand.hbm [shape: f32[8,128], index: 11, kind: output, shape index: {2}]
  %s12 = inlined_call_operand.hbm [shape: f32[8,128], index: 12, kind: output, shape index: {3}]
  %13 = xla_tuple %s9, %s10, %s11, %s12
  %s14 = sld [smem:[#allocation0]]
  $region98: #{txtnet_t_forward.1} parent=0
    _
  %s16 = ssub.s32 1, %s14
  %s17 = scalar_select 0, %s16, %s14
  $region1: #{txtnet_t_forward.1} parent=0
    #allocation3 [shape = 'u8[262144]{0}', space=vmem, size = 0x40000, scoped, tag = 'input window, operand 1, single buffered']
    #allocation4 [shape = 's32[1]{0}', space=sflag, size = 0x4, scoped, tag = 'scoped memory for txtnet_t_forward.1']
    #allocation5 [shape = 's32[1]{0}', space=sflag, size = 0x4, scoped, tag = 'scoped memory for txtnet_t_forward.1']
    #allocation6 [shape = 'u8[262144]{0}', space=vmem, size = 0x40000, scoped, tag = 'input window, operand 3, single buffered']
    #allocation7 [shape = 's32[1]{0}', space=sflag, size = 0x4, scoped, tag = 'scoped memory for txtnet_t_forward.1']
    #allocation8 [shape = 'u8[65536]{0}', space=vmem, size = 0x10000, scoped, tag = 'input window, operand 5, single buffered']
    #allocation9 [shape = 'u8[32768]{0}', space=vmem, size = 0x8000, scoped, tag = 'input window, operand 7, single buffered']
    #allocation10 [shape = 's32[1]{0}', space=sflag, size = 0x4, scoped, tag = 'scoped memory for txtnet_t_forward.1']
    #allocation11 [shape = 'u8[16384]{0}', space=vmem, size = 0x4000, scoped, tag = 'output window, operand 0, single buffered']
    #allocation12 [shape = 'u8[8192]{0}', space=vmem, size = 0x2000, scoped, tag = 'output window, operand 1, single buffered']
    #allocation13 [shape = 's32[1]{0}', space=sflag, size = 0x4, scoped, tag = 'scoped memory for txtnet_t_forward.1']
    #allocation14 [shape = 'u8[4096]{0}', space=vmem, size = 0x1000, scoped, tag = 'output window, operand 2, single buffered']
    #allocation15 [shape = 'u8[4096]{0}', space=vmem, size = 0x1000, scoped, tag = 'output window, operand 3, single buffered']
    #allocation16 [shape = 's32[1]{0}', space=sflag, size = 0x4, scoped, tag = 'scoped memory for txtnet_t_forward.1']
    %18 = vsyncpa [#allocation4], 0
    %19 = vsyncpa [#allocation7], 0
    %20 = vsyncpa [#allocation10], 0
    %21 = vsyncpa [#allocation5], 0
    %22 = vsyncpa [#allocation13], 0
    %23 = vsyncpa [#allocation16], 0
    // Predicated region
    $region2: #{txtnet_t_forward.1} parent=1 // pred_check
      _
    $region3: #{txtnet_t_forward.1} parent=1 // pred_check_branch
      %25 = sbr.rel (0) target = $region5
    $region4: #{txtnet_t_forward.1} parent=1 // pred_region
      _
    $region5: #{txtnet_t_forward.1} parent=1 // pred_fallthru
      _
    // Predicated region
    $region6: #{txtnet_t_forward.1} parent=1 // pred_check
      _
    $region7: #{txtnet_t_forward.1} parent=1 // pred_check_branch
      %27 = sbr.rel (0) target = $region9
    $region8: #{txtnet_t_forward.1} parent=1 // pred_region
      %29 = vsyncadd [#allocation4], 0
      %s30 = sshll.u32 %s1, 4
      %s31 = int_to_ptr.hbm [resolvable:$true] %s30
      %s32 = sshll.u32 [#allocation3], 4
      %s33 = int_to_ptr.vmem [resolvable:$true] %s32
      %38 = dma.hbm_to_vmem [thread:$0]  %s31, 8192, %s33, [#allocation4], 256, 256, 16
    $region9: #{txtnet_t_forward.1} parent=1 // pred_fallthru
      _
    // Predicated region
    $region10: #{txtnet_t_forward.1} parent=1 // pred_check
      _
    $region11: #{txtnet_t_forward.1} parent=1 // pred_check_branch
      %40 = sbr.rel (0) target = $region13
    $region12: #{txtnet_t_forward.1} parent=1 // pred_region
      _
    $region13: #{txtnet_t_forward.1} parent=1 // pred_fallthru
      _
    // Predicated region
    $region14: #{txtnet_t_forward.1} parent=1 // pred_check
      _
    $region15: #{txtnet_t_forward.1} parent=1 // pred_check_branch
      %42 = sbr.rel (0) target = $region17
    $region16: #{txtnet_t_forward.1} parent=1 // pred_region
      %44 = vsyncadd [#allocation7], 0
      %s45 = sshll.u32 %s3, 4
      %s46 = int_to_ptr.hbm [resolvable:$true] %s45
      %s47 = sshll.u32 [#allocation6], 4
      %s48 = int_to_ptr.vmem [resolvable:$true] %s47
      %53 = dma.hbm_to_vmem [thread:$0]  %s46, 8192, %s48, [#allocation7], 128, 128, 8
    $region17: #{txtnet_t_forward.1} parent=1 // pred_fallthru
      _
    // Predicated region
    $region18: #{txtnet_t_forward.1} parent=1 // pred_check
      _
    $region19: #{txtnet_t_forward.1} parent=1 // pred_check_branch
      %55 = sbr.rel (0) target = $region21
    $region20: #{txtnet_t_forward.1} parent=1 // pred_region
      _
    $region21: #{txtnet_t_forward.1} parent=1 // pred_fallthru
      _
    // Predicated region
    $region22: #{txtnet_t_forward.1} parent=1 // pred_check
      _
    $region23: #{txtnet_t_forward.1} parent=1 // pred_check_branch
      %57 = sbr.rel (0) target = $region25
    $region24: #{txtnet_t_forward.1} parent=1 // pred_region
      %59 = vsyncadd [#allocation7], 0
      %s60 = sshll.u32 %s5, 4
      %s61 = int_to_ptr.hbm [resolvable:$true] %s60
      %s62 = sshll.u32 [#allocation8], 4
      %s63 = int_to_ptr.vmem [resolvable:$true] %s62
      %68 = dma.hbm_to_vmem [thread:$0]  %s61, 2048, %s63, [#allocation7], 64, 64, 4
    $region25: #{txtnet_t_forward.1} parent=1 // pred_fallthru
      _
    // Predicated region
    $region26: #{txtnet_t_forward.1} parent=1 // pred_check
      _
    $region27: #{txtnet_t_forward.1} parent=1 // pred_check_branch
      %70 = sbr.rel (0) target = $region29
    $region28: #{txtnet_t_forward.1} parent=1 // pred_region
      _
    $region29: #{txtnet_t_forward.1} parent=1 // pred_fallthru
      _
    // Predicated region
    $region30: #{txtnet_t_forward.1} parent=1 // pred_check
      _
    $region31: #{txtnet_t_forward.1} parent=1 // pred_check_branch
      %72 = sbr.rel (0) target = $region33
    $region32: #{txtnet_t_forward.1} parent=1 // pred_region
      %74 = vsyncadd [#allocation10], 0
      %s75 = sshll.u32 %s7, 4
      %s76 = int_to_ptr.hbm [resolvable:$true] %s75
      %s77 = sshll.u32 [#allocation9], 4
      %s78 = int_to_ptr.vmem [resolvable:$true] %s77
      %83 = dma.hbm_to_vmem [thread:$0]  %s76, 1024, %s78, [#allocation10], 64, 64, 4
    $region33: #{txtnet_t_forward.1} parent=1 // pred_fallthru
      _
    // Predicated region
    $region34: #{txtnet_t_forward.1} parent=1 // pred_check
      _
    $region35: #{txtnet_t_forward.1} parent=1 // pred_check_branch
      %85 = sbr.rel (0) target = $region37
    $region36: #{txtnet_t_forward.1} parent=1 // pred_region
      _
    $region37: #{txtnet_t_forward.1} parent=1 // pred_fallthru
      _
    // Predicated region
    $region38: #{txtnet_t_forward.1} parent=1 // pred_check
      _
    $region39: #{txtnet_t_forward.1} parent=1 // pred_check_branch
      %87 = sbr.rel (0) target = $region41
    $region40: #{txtnet_t_forward.1} parent=1 // pred_region
      %89 = dma.done [#allocation4], 8192
    $region41: #{txtnet_t_forward.1} parent=1 // pred_fallthru
      _
    // Predicated region
    $region42: #{txtnet_t_forward.1} parent=1 // pred_check
      _
    $region43: #{txtnet_t_forward.1} parent=1 // pred_check_branch
      %91 = sbr.rel (0) target = $region45
    $region44: #{txtnet_t_forward.1} parent=1 // pred_region
      %93 = dma.done [#allocation7], 8192
    $region45: #{txtnet_t_forward.1} parent=1 // pred_fallthru
      _
    // Predicated region
    $region46: #{txtnet_t_forward.1} parent=1 // pred_check
      _
    $region47: #{txtnet_t_forward.1} parent=1 // pred_check_branch
      %95 = sbr.rel (0) target = $region49
    $region48: #{txtnet_t_forward.1} parent=1 // pred_region
      %97 = dma.done [#allocation7], 2048
    $region49: #{txtnet_t_forward.1} parent=1 // pred_fallthru
      _
    // Predicated region
    $region50: #{txtnet_t_forward.1} parent=1 // pred_check
      _
    $region51: #{txtnet_t_forward.1} parent=1 // pred_check_branch
      %99 = sbr.rel (0) target = $region53
    $region52: #{txtnet_t_forward.1} parent=1 // pred_region
      %101 = dma.done [#allocation10], 1024
    $region53: #{txtnet_t_forward.1} parent=1 // pred_fallthru
      _
    %v102 = vld [vmem:[%s0] sm:$0xff]
    %v103 = vld [vmem:[#allocation3] sm:$0xff]
    %v104 = vld [vmem:[#allocation3 + $0x8] sm:$0xff]
    %v105 = vld [vmem:[#allocation3 + $0x10] sm:$0xff]
    %v106 = vld [vmem:[#allocation3 + $0x18] sm:$0xff]
    %v107 = vld [vmem:[#allocation3 + $0x20] sm:$0xff]
    %v108 = vld [vmem:[#allocation3 + $0x28] sm:$0xff]
    %v109 = vld [vmem:[#allocation3 + $0x30] sm:$0xff]
    %v110 = vld [vmem:[#allocation3 + $0x38] sm:$0xff]
    %v111 = vld [vmem:[#allocation3 + $0x40] sm:$0xff]
    %v112 = vld [vmem:[#allocation3 + $0x48] sm:$0xff]
    %v113 = vld [vmem:[#allocation3 + $0x50] sm:$0xff]
    %v114 = vld [vmem:[#allocation3 + $0x58] sm:$0xff]
    %v115 = vld [vmem:[#allocation3 + $0x60] sm:$0xff]
    %v116 = vld [vmem:[#allocation3 + $0x68] sm:$0xff]
    %v117 = vld [vmem:[#allocation3 + $0x70] sm:$0xff]
    %v118 = vld [vmem:[#allocation3 + $0x78] sm:$0xff]
    %v119 = vld [vmem:[#allocation3 + $0x80] sm:$0xff]
    %v120 = vld [vmem:[#allocation3 + $0x88] sm:$0xff]
    %v121 = vld [vmem:[#allocation3 + $0x90] sm:$0xff]
    %v122 = vld [vmem:[#allocation3 + $0x98] sm:$0xff]
    %v123 = vld [vmem:[#allocation3 + $0xa0] sm:$0xff]
    %v124 = vld [vmem:[#allocation3 + $0xa8] sm:$0xff]
    %v125 = vld [vmem:[#allocation3 + $0xb0] sm:$0xff]
    %v126 = vld [vmem:[#allocation3 + $0xb8] sm:$0xff]
    %v127 = vld [vmem:[#allocation3 + $0xc0] sm:$0xff]
    %v128 = vld [vmem:[#allocation3 + $0xc8] sm:$0xff]
    %v129 = vld [vmem:[#allocation3 + $0xd0] sm:$0xff]
    %v130 = vld [vmem:[#allocation3 + $0xd8] sm:$0xff]
    %v131 = vld [vmem:[#allocation3 + $0xe0] sm:$0xff]
    %v132 = vld [vmem:[#allocation3 + $0xe8] sm:$0xff]
    %v133 = vld [vmem:[#allocation3 + $0xf0] sm:$0xff]
    %v134 = vld [vmem:[#allocation3 + $0xf8] sm:$0xff]
    %v135 = vld [vmem:[#allocation3 + $0x100] sm:$0xff]
    %v136 = vld [vmem:[#allocation3 + $0x108] sm:$0xff]
    %v137 = vld [vmem:[#allocation3 + $0x110] sm:$0xff]
    %v138 = vld [vmem:[#allocation3 + $0x118] sm:$0xff]
    %v139 = vld [vmem:[#allocation3 + $0x120] sm:$0xff]
    %v140 = vld [vmem:[#allocation3 + $0x128] sm:$0xff]
    %v141 = vld [vmem:[#allocation3 + $0x130] sm:$0xff]
    %v142 = vld [vmem:[#allocation3 + $0x138] sm:$0xff]
    %v143 = vld [vmem:[#allocation3 + $0x140] sm:$0xff]
    %v144 = vld [vmem:[#allocation3 + $0x148] sm:$0xff]
    %v145 = vld [vmem:[#allocation3 + $0x150] sm:$0xff]
    %v146 = vld [vmem:[#allocation3 + $0x158] sm:$0xff]
    %v147 = vld [vmem:[#allocation3 + $0x160] sm:$0xff]
    %v148 = vld [vmem:[#allocation3 + $0x168] sm:$0xff]
    %v149 = vld [vmem:[#allocation3 + $0x170] sm:$0xff]
    %v150 = vld [vmem:[#allocation3 + $0x178] sm:$0xff]
    %v151 = vld [vmem:[#allocation3 + $0x180] sm:$0xff]
    %v152 = vld [vmem:[#allocation3 + $0x188] sm:$0xff]
    %v153 = vld [vmem:[#allocation3 + $0x190] sm:$0xff]
    %v154 = vld [vmem:[#allocation3 + $0x198] sm:$0xff]
    %v155 = vld [vmem:[#allocation3 + $0x1a0] sm:$0xff]
    %v156 = vld [vmem:[#allocation3 + $0x1a8] sm:$0xff]
    %v157 = vld [vmem:[#allocation3 + $0x1b0] sm:$0xff]
    %v158 = vld [vmem:[#allocation3 + $0x1b8] sm:$0xff]
    %v159 = vld [vmem:[#allocation3 + $0x1c0] sm:$0xff]
    %v160 = vld [vmem:[#allocation3 + $0x1c8] sm:$0xff]
    %v161 = vld [vmem:[#allocation3 + $0x1d0] sm:$0xff]
    %v162 = vld [vmem:[#allocation3 + $0x1d8] sm:$0xff]
    %v163 = vld [vmem:[#allocation3 + $0x1e0] sm:$0xff]
    %v164 = vld [vmem:[#allocation3 + $0x1e8] sm:$0xff]
    %v165 = vld [vmem:[#allocation3 + $0x1f0] sm:$0xff]
    %v166 = vld [vmem:[#allocation3 + $0x1f8] sm:$0xff]
    %v167 = vld [vmem:[%s2] sm:$0xf]
    %v169 = vperm.slane %v167, 0
    %v170 = vperm.slane %v167, 1
    %v171 = vperm.slane %v167, 2
    %v172 = vperm.slane %v167, 3
    %v178 = vunpack.c.l.b16 %v102
    %v179 = vunpack.c.h.b16 %v102
    %v180 = vpack.c.b16 %v178, %v178
    %v181 = vpack.c.b16 %v179, %v179
    %v248 = vunpack.c.l.b16 %v103
    %v249 = vunpack.c.h.b16 %v103
    %v250 = vunpack.c.l.b16 %v104
    %v251 = vunpack.c.h.b16 %v104
    %v252 = vunpack.c.l.b16 %v105
    %v253 = vunpack.c.h.b16 %v105
    %v254 = vunpack.c.l.b16 %v106
    %v255 = vunpack.c.h.b16 %v106
    %v256 = vunpack.c.l.b16 %v107
    %v257 = vunpack.c.h.b16 %v107
    %v258 = vunpack.c.l.b16 %v108
    %v259 = vunpack.c.h.b16 %v108
    %v260 = vunpack.c.l.b16 %v109
    %v261 = vunpack.c.h.b16 %v109
    %v262 = vunpack.c.l.b16 %v110
    %v263 = vunpack.c.h.b16 %v110
    %v264 = vunpack.c.l.b16 %v111
    %v265 = vunpack.c.h.b16 %v111
    %v266 = vunpack.c.l.b16 %v112
    %v267 = vunpack.c.h.b16 %v112
    %v268 = vunpack.c.l.b16 %v113
    %v269 = vunpack.c.h.b16 %v113
    %v270 = vunpack.c.l.b16 %v114
    %v271 = vunpack.c.h.b16 %v114
    %v272 = vunpack.c.l.b16 %v115
    %v273 = vunpack.c.h.b16 %v115
    %v274 = vunpack.c.l.b16 %v116
    %v275 = vunpack.c.h.b16 %v116
    %v276 = vunpack.c.l.b16 %v117
    %v277 = vunpack.c.h.b16 %v117
    %v278 = vunpack.c.l.b16 %v118
    %v279 = vunpack.c.h.b16 %v118
    %v280 = vunpack.c.l.b16 %v119
    %v281 = vunpack.c.h.b16 %v119
    %v282 = vunpack.c.l.b16 %v120
    %v283 = vunpack.c.h.b16 %v120
    %v284 = vunpack.c.l.b16 %v121
    %v285 = vunpack.c.h.b16 %v121
    %v286 = vunpack.c.l.b16 %v122
    %v287 = vunpack.c.h.b16 %v122
    %v288 = vunpack.c.l.b16 %v123
    %v289 = vunpack.c.h.b16 %v123
    %v290 = vunpack.c.l.b16 %v124
    %v291 = vunpack.c.h.b16 %v124
    %v292 = vunpack.c.l.b16 %v125
    %v293 = vunpack.c.h.b16 %v125
    %v294 = vunpack.c.l.b16 %v126
    %v295 = vunpack.c.h.b16 %v126
    %v296 = vunpack.c.l.b16 %v127
    %v297 = vunpack.c.h.b16 %v127
    %v298 = vunpack.c.l.b16 %v128
    %v299 = vunpack.c.h.b16 %v128
    %v300 = vunpack.c.l.b16 %v129
    %v301 = vunpack.c.h.b16 %v129
    %v302 = vunpack.c.l.b16 %v130
    %v303 = vunpack.c.h.b16 %v130
    %v304 = vunpack.c.l.b16 %v131
    %v305 = vunpack.c.h.b16 %v131
    %v306 = vunpack.c.l.b16 %v132
    %v307 = vunpack.c.h.b16 %v132
    %v308 = vunpack.c.l.b16 %v133
    %v309 = vunpack.c.h.b16 %v133
    %v310 = vunpack.c.l.b16 %v134
    %v311 = vunpack.c.h.b16 %v134
    %v312 = vunpack.c.l.b16 %v135
    %v313 = vunpack.c.h.b16 %v135
    %v314 = vunpack.c.l.b16 %v136
    %v315 = vunpack.c.h.b16 %v136
    %v316 = vunpack.c.l.b16 %v137
    %v317 = vunpack.c.h.b16 %v137
    %v318 = vunpack.c.l.b16 %v138
    %v319 = vunpack.c.h.b16 %v138
    %v320 = vunpack.c.l.b16 %v139
    %v321 = vunpack.c.h.b16 %v139
    %v322 = vunpack.c.l.b16 %v140
    %v323 = vunpack.c.h.b16 %v140
    %v324 = vunpack.c.l.b16 %v141
    %v325 = vunpack.c.h.b16 %v141
    %v326 = vunpack.c.l.b16 %v142
    %v327 = vunpack.c.h.b16 %v142
    %v328 = vunpack.c.l.b16 %v143
    %v329 = vunpack.c.h.b16 %v143
    %v330 = vunpack.c.l.b16 %v144
    %v331 = vunpack.c.h.b16 %v144
    %v332 = vunpack.c.l.b16 %v145
    %v333 = vunpack.c.h.b16 %v145
    %v334 = vunpack.c.l.b16 %v146
    %v335 = vunpack.c.h.b16 %v146
    %v336 = vunpack.c.l.b16 %v147
    %v337 = vunpack.c.h.b16 %v147
    %v338 = vunpack.c.l.b16 %v148
    %v339 = vunpack.c.h.b16 %v148
    %v340 = vunpack.c.l.b16 %v149
    %v341 = vunpack.c.h.b16 %v149
    %v342 = vunpack.c.l.b16 %v150
    %v343 = vunpack.c.h.b16 %v150
    %v344 = vunpack.c.l.b16 %v151
    %v345 = vunpack.c.h.b16 %v151
    %v346 = vunpack.c.l.b16 %v152
    %v347 = vunpack.c.h.b16 %v152
    %v348 = vunpack.c.l.b16 %v153
    %v349 = vunpack.c.h.b16 %v153
    %v350 = vunpack.c.l.b16 %v154
    %v351 = vunpack.c.h.b16 %v154
    %v352 = vunpack.c.l.b16 %v155
    %v353 = vunpack.c.h.b16 %v155
    %v354 = vunpack.c.l.b16 %v156
    %v355 = vunpack.c.h.b16 %v156
    %v356 = vunpack.c.l.b16 %v157
    %v357 = vunpack.c.h.b16 %v157
    %v358 = vunpack.c.l.b16 %v158
    %v359 = vunpack.c.h.b16 %v158
    %v360 = vunpack.c.l.b16 %v159
    %v361 = vunpack.c.h.b16 %v159
    %v362 = vunpack.c.l.b16 %v160
    %v363 = vunpack.c.h.b16 %v160
    %v364 = vunpack.c.l.b16 %v161
    %v365 = vunpack.c.h.b16 %v161
    %v366 = vunpack.c.l.b16 %v162
    %v367 = vunpack.c.h.b16 %v162
    %v368 = vunpack.c.l.b16 %v163
    %v369 = vunpack.c.h.b16 %v163
    %v370 = vunpack.c.l.b16 %v164
    %v371 = vunpack.c.h.b16 %v164
    %v372 = vunpack.c.l.b16 %v165
    %v373 = vunpack.c.h.b16 %v165
    %v374 = vunpack.c.l.b16 %v166
    %v375 = vunpack.c.h.b16 %v166
    %v376 = vpack.c.b16 %v252, %v248
    %v377 = vpack.c.b16 %v253, %v249
    %v378 = vpack.c.b16 %v254, %v250
    %v379 = vpack.c.b16 %v255, %v251
    %v380 = vpack.c.b16 %v260, %v256
    %v381 = vpack.c.b16 %v261, %v257
    %v382 = vpack.c.b16 %v262, %v258
    %v383 = vpack.c.b16 %v263, %v259
    %v384 = vpack.c.b16 %v268, %v264
    %v385 = vpack.c.b16 %v269, %v265
    %v386 = vpack.c.b16 %v270, %v266
    %v387 = vpack.c.b16 %v271, %v267
    %v388 = vpack.c.b16 %v276, %v272
    %v389 = vpack.c.b16 %v277, %v273
    %v390 = vpack.c.b16 %v278, %v274
    %v391 = vpack.c.b16 %v279, %v275
    %v392 = vpack.c.b16 %v284, %v280
    %v393 = vpack.c.b16 %v285, %v281
    %v394 = vpack.c.b16 %v286, %v282
    %v395 = vpack.c.b16 %v287, %v283
    %v396 = vpack.c.b16 %v292, %v288
    %v397 = vpack.c.b16 %v293, %v289
    %v398 = vpack.c.b16 %v294, %v290
    %v399 = vpack.c.b16 %v295, %v291
    %v400 = vpack.c.b16 %v300, %v296
    %v401 = vpack.c.b16 %v301, %v297
    %v402 = vpack.c.b16 %v302, %v298
    %v403 = vpack.c.b16 %v303, %v299
    %v404 = vpack.c.b16 %v308, %v304
    %v405 = vpack.c.b16 %v309, %v305
    %v406 = vpack.c.b16 %v310, %v306
    %v407 = vpack.c.b16 %v311, %v307
    %v408 = vpack.c.b16 %v316, %v312
    %v409 = vpack.c.b16 %v317, %v313
    %v410 = vpack.c.b16 %v318, %v314
    %v411 = vpack.c.b16 %v319, %v315
    %v412 = vpack.c.b16 %v324, %v320
    %v413 = vpack.c.b16 %v325, %v321
    %v414 = vpack.c.b16 %v326, %v322
    %v415 = vpack.c.b16 %v327, %v323
    %v416 = vpack.c.b16 %v332, %v328
    %v417 = vpack.c.b16 %v333, %v329
    %v418 = vpack.c.b16 %v334, %v330
    %v419 = vpack.c.b16 %v335, %v331
    %v420 = vpack.c.b16 %v340, %v336
    %v421 = vpack.c.b16 %v341, %v337
    %v422 = vpack.c.b16 %v342, %v338
    %v423 = vpack.c.b16 %v343, %v339
    %v424 = vpack.c.b16 %v348, %v344
    %v425 = vpack.c.b16 %v349, %v345
    %v426 = vpack.c.b16 %v350, %v346
    %v427 = vpack.c.b16 %v351, %v347
    %v428 = vpack.c.b16 %v356, %v352
    %v429 = vpack.c.b16 %v357, %v353
    %v430 = vpack.c.b16 %v358, %v354
    %v431 = vpack.c.b16 %v359, %v355
    %v432 = vpack.c.b16 %v364, %v360
    %v433 = vpack.c.b16 %v365, %v361
    %v434 = vpack.c.b16 %v366, %v362
    %v435 = vpack.c.b16 %v367, %v363
    %v436 = vpack.c.b16 %v372, %v368
    %v437 = vpack.c.b16 %v373, %v369
    %v438 = vpack.c.b16 %v374, %v370
    %v439 = vpack.c.b16 %v375, %v371
    %504 = vmatpush.bf16.msra.mxu0 %v404
    %505 = vmatpush.bf16.msra.mxu0 %v400
    %506 = vmatpush.bf16.msra.mxu0 %v396
    %507 = vmatpush.bf16.msra.mxu0 %v392
    %508 = vmatpush.bf16.msra.mxu0 %v388
    %509 = vmatpush.bf16.msra.mxu0 %v384
    %510 = vmatpush.bf16.msra.mxu0 %v380
    %511 = vmatpush.bf16.msra.mxu0 %v376
    %512 = vmatmul.bf16.gmra.mxu0 %v180
    %v513 = vpop.f32.mrf.mxu0
    %v514 = vadd.f32 %v169, %v513
    %v515 = vpop.f32.mrf.mxu0
    %516 = vdwg.mxu0
    %517 = vmatpush.bf16.msra.mxu0 %v436
    %518 = vmatpush.bf16.msra.mxu0 %v432
    %519 = vmatpush.bf16.msra.mxu0 %v428
    %520 = vmatpush.bf16.msra.mxu0 %v424
    %521 = vmatpush.bf16.msra.mxu0 %v420
    %522 = vmatpush.bf16.msra.mxu0 %v416
    %523 = vmatpush.bf16.msra.mxu0 %v412
    %524 = vmatpush.bf16.msra.mxu0 %v408
    %525 = vmatmul.bf16.gmra.mxu0 %v181
    %v526 = vpop.f32.mrf.mxu0
    %v527 = vadd.f32 %v514, %v526
    %v528 = vpop.f32.mrf.mxu0
    %529 = vdwg.mxu0
    %530 = vmatpush.bf16.msra.mxu0 %v405
    %531 = vmatpush.bf16.msra.mxu0 %v401
    %532 = vmatpush.bf16.msra.mxu0 %v397
    %533 = vmatpush.bf16.msra.mxu0 %v393
    %534 = vmatpush.bf16.msra.mxu0 %v389
    %535 = vmatpush.bf16.msra.mxu0 %v385
    %536 = vmatpush.bf16.msra.mxu0 %v381
    %537 = vmatpush.bf16.msra.mxu0 %v377
    %538 = vmatmul.bf16.gmra.mxu0 %v180
    %v539 = vpop.f32.mrf.mxu0
    %v540 = vadd.f32 %v170, %v539
    %v541 = vpop.f32.mrf.mxu0
    %542 = vdwg.mxu0
    %543 = vmatpush.bf16.msra.mxu0 %v437
    %544 = vmatpush.bf16.msra.mxu0 %v433
    %545 = vmatpush.bf16.msra.mxu0 %v429
    %546 = vmatpush.bf16.msra.mxu0 %v425
    %547 = vmatpush.bf16.msra.mxu0 %v421
    %548 = vmatpush.bf16.msra.mxu0 %v417
    %549 = vmatpush.bf16.msra.mxu0 %v413
    %550 = vmatpush.bf16.msra.mxu0 %v409
    %551 = vmatmul.bf16.gmra.mxu0 %v181
    %v552 = vpop.f32.mrf.mxu0
    %v553 = vadd.f32 %v540, %v552
    %v554 = vpop.f32.mrf.mxu0
    %555 = vdwg.mxu0
    %556 = vmatpush.bf16.msra.mxu0 %v406
    %557 = vmatpush.bf16.msra.mxu0 %v402
    %558 = vmatpush.bf16.msra.mxu0 %v398
    %559 = vmatpush.bf16.msra.mxu0 %v394
    %560 = vmatpush.bf16.msra.mxu0 %v390
    %561 = vmatpush.bf16.msra.mxu0 %v386
    %562 = vmatpush.bf16.msra.mxu0 %v382
    %563 = vmatpush.bf16.msra.mxu0 %v378
    %564 = vmatmul.bf16.gmra.mxu0 %v180
    %v565 = vpop.f32.mrf.mxu0
    %v566 = vadd.f32 %v171, %v565
    %v567 = vpop.f32.mrf.mxu0
    %568 = vdwg.mxu0
    %569 = vmatpush.bf16.msra.mxu0 %v438
    %570 = vmatpush.bf16.msra.mxu0 %v434
    %571 = vmatpush.bf16.msra.mxu0 %v430
    %572 = vmatpush.bf16.msra.mxu0 %v426
    %573 = vmatpush.bf16.msra.mxu0 %v422
    %574 = vmatpush.bf16.msra.mxu0 %v418
    %575 = vmatpush.bf16.msra.mxu0 %v414
    %576 = vmatpush.bf16.msra.mxu0 %v410
    %577 = vmatmul.bf16.gmra.mxu0 %v181
    %v578 = vpop.f32.mrf.mxu0
    %v579 = vadd.f32 %v566, %v578
    %v580 = vpop.f32.mrf.mxu0
    %581 = vdwg.mxu0
    %582 = vmatpush.bf16.msra.mxu0 %v407
    %583 = vmatpush.bf16.msra.mxu0 %v403
    %584 = vmatpush.bf16.msra.mxu0 %v399
    %585 = vmatpush.bf16.msra.mxu0 %v395
    %586 = vmatpush.bf16.msra.mxu0 %v391
    %587 = vmatpush.bf16.msra.mxu0 %v387
    %588 = vmatpush.bf16.msra.mxu0 %v383
    %589 = vmatpush.bf16.msra.mxu0 %v379
    %590 = vmatmul.bf16.gmra.mxu0 %v180
    %v591 = vpop.f32.mrf.mxu0
    %v592 = vadd.f32 %v172, %v591
    %v593 = vpop.f32.mrf.mxu0
    %594 = vdwg.mxu0
    %595 = vmatpush.bf16.msra.mxu0 %v439
    %596 = vmatpush.bf16.msra.mxu0 %v435
    %597 = vmatpush.bf16.msra.mxu0 %v431
    %598 = vmatpush.bf16.msra.mxu0 %v427
    %599 = vmatpush.bf16.msra.mxu0 %v423
    %600 = vmatpush.bf16.msra.mxu0 %v419
    %601 = vmatpush.bf16.msra.mxu0 %v415
    %602 = vmatpush.bf16.msra.mxu0 %v411
    %603 = vmatmul.bf16.gmra.mxu0 %v181
    %v604 = vpop.f32.mrf.mxu0
    %v605 = vadd.f32 %v592, %v604
    %v606 = vpop.f32.mrf.mxu0
    %607 = vdwg.mxu0
    %v608 = vmax.f32 %v527, 0.0
    %v609 = vmax.f32 %v553, 0.0
    %v610 = vmax.f32 %v579, 0.0
    %v611 = vmax.f32 %v605, 0.0
    %612 = vst [vmem:[#allocation11] sm:$0xff] %v608
    %613 = vst [vmem:[#allocation11 + $0x8] sm:$0xff] %v609
    %614 = vst [vmem:[#allocation11 + $0x10] sm:$0xff] %v610
    %615 = vst [vmem:[#allocation11 + $0x18] sm:$0xff] %v611
    %v616 = vpack.c.bf16 %v608, %v608
    %v617 = vpack.c.bf16 %v609, %v609
    %v618 = vpack.c.bf16 %v610, %v610
    %v619 = vpack.c.bf16 %v611, %v611
    %v620 = vld [vmem:[#allocation6] sm:$0xff]
    %v621 = vld [vmem:[#allocation6 + $0x8] sm:$0xff]
    %v622 = vld [vmem:[#allocation6 + $0x10] sm:$0xff]
    %v623 = vld [vmem:[#allocation6 + $0x18] sm:$0xff]
    %v624 = vld [vmem:[#allocation6 + $0x20] sm:$0xff]
    %v625 = vld [vmem:[#allocation6 + $0x28] sm:$0xff]
    %v626 = vld [vmem:[#allocation6 + $0x30] sm:$0xff]
    %v627 = vld [vmem:[#allocation6 + $0x38] sm:$0xff]
    %v628 = vld [vmem:[#allocation6 + $0x40] sm:$0xff]
    %v629 = vld [vmem:[#allocation6 + $0x48] sm:$0xff]
    %v630 = vld [vmem:[#allocation6 + $0x50] sm:$0xff]
    %v631 = vld [vmem:[#allocation6 + $0x58] sm:$0xff]
    %v632 = vld [vmem:[#allocation6 + $0x60] sm:$0xff]
    %v633 = vld [vmem:[#allocation6 + $0x68] sm:$0xff]
    %v634 = vld [vmem:[#allocation6 + $0x70] sm:$0xff]
    %v635 = vld [vmem:[#allocation6 + $0x78] sm:$0xff]
    %v636 = vld [vmem:[#allocation6 + $0x80] sm:$0xff]
    %v637 = vld [vmem:[#allocation6 + $0x88] sm:$0xff]
    %v638 = vld [vmem:[#allocation6 + $0x90] sm:$0xff]
    %v639 = vld [vmem:[#allocation6 + $0x98] sm:$0xff]
    %v640 = vld [vmem:[#allocation6 + $0xa0] sm:$0xff]
    %v641 = vld [vmem:[#allocation6 + $0xa8] sm:$0xff]
    %v642 = vld [vmem:[#allocation6 + $0xb0] sm:$0xff]
    %v643 = vld [vmem:[#allocation6 + $0xb8] sm:$0xff]
    %v644 = vld [vmem:[#allocation6 + $0xc0] sm:$0xff]
    %v645 = vld [vmem:[#allocation6 + $0xc8] sm:$0xff]
    %v646 = vld [vmem:[#allocation6 + $0xd0] sm:$0xff]
    %v647 = vld [vmem:[#allocation6 + $0xd8] sm:$0xff]
    %v648 = vld [vmem:[#allocation6 + $0xe0] sm:$0xff]
    %v649 = vld [vmem:[#allocation6 + $0xe8] sm:$0xff]
    %v650 = vld [vmem:[#allocation6 + $0xf0] sm:$0xff]
    %v651 = vld [vmem:[#allocation6 + $0xf8] sm:$0xff]
    %v652 = vld [vmem:[#allocation6 + $0x100] sm:$0xff]
    %v653 = vld [vmem:[#allocation6 + $0x108] sm:$0xff]
    %v654 = vld [vmem:[#allocation6 + $0x110] sm:$0xff]
    %v655 = vld [vmem:[#allocation6 + $0x118] sm:$0xff]
    %v656 = vld [vmem:[#allocation6 + $0x120] sm:$0xff]
    %v657 = vld [vmem:[#allocation6 + $0x128] sm:$0xff]
    %v658 = vld [vmem:[#allocation6 + $0x130] sm:$0xff]
    %v659 = vld [vmem:[#allocation6 + $0x138] sm:$0xff]
    %v660 = vld [vmem:[#allocation6 + $0x140] sm:$0xff]
    %v661 = vld [vmem:[#allocation6 + $0x148] sm:$0xff]
    %v662 = vld [vmem:[#allocation6 + $0x150] sm:$0xff]
    %v663 = vld [vmem:[#allocation6 + $0x158] sm:$0xff]
    %v664 = vld [vmem:[#allocation6 + $0x160] sm:$0xff]
    %v665 = vld [vmem:[#allocation6 + $0x168] sm:$0xff]
    %v666 = vld [vmem:[#allocation6 + $0x170] sm:$0xff]
    %v667 = vld [vmem:[#allocation6 + $0x178] sm:$0xff]
    %v668 = vld [vmem:[#allocation6 + $0x180] sm:$0xff]
    %v669 = vld [vmem:[#allocation6 + $0x188] sm:$0xff]
    %v670 = vld [vmem:[#allocation6 + $0x190] sm:$0xff]
    %v671 = vld [vmem:[#allocation6 + $0x198] sm:$0xff]
    %v672 = vld [vmem:[#allocation6 + $0x1a0] sm:$0xff]
    %v673 = vld [vmem:[#allocation6 + $0x1a8] sm:$0xff]
    %v674 = vld [vmem:[#allocation6 + $0x1b0] sm:$0xff]
    %v675 = vld [vmem:[#allocation6 + $0x1b8] sm:$0xff]
    %v676 = vld [vmem:[#allocation6 + $0x1c0] sm:$0xff]
    %v677 = vld [vmem:[#allocation6 + $0x1c8] sm:$0xff]
    %v678 = vld [vmem:[#allocation6 + $0x1d0] sm:$0xff]
    %v679 = vld [vmem:[#allocation6 + $0x1d8] sm:$0xff]
    %v680 = vld [vmem:[#allocation6 + $0x1e0] sm:$0xff]
    %v681 = vld [vmem:[#allocation6 + $0x1e8] sm:$0xff]
    %v682 = vld [vmem:[#allocation6 + $0x1f0] sm:$0xff]
    %v683 = vld [vmem:[#allocation6 + $0x1f8] sm:$0xff]
    %v748 = vunpack.c.l.b16 %v620
    %v749 = vunpack.c.h.b16 %v620
    %v750 = vunpack.c.l.b16 %v621
    %v751 = vunpack.c.h.b16 %v621
    %v752 = vunpack.c.l.b16 %v622
    %v753 = vunpack.c.h.b16 %v622
    %v754 = vunpack.c.l.b16 %v623
    %v755 = vunpack.c.h.b16 %v623
    %v756 = vunpack.c.l.b16 %v624
    %v757 = vunpack.c.h.b16 %v624
    %v758 = vunpack.c.l.b16 %v625
    %v759 = vunpack.c.h.b16 %v625
    %v760 = vunpack.c.l.b16 %v626
    %v761 = vunpack.c.h.b16 %v626
    %v762 = vunpack.c.l.b16 %v627
    %v763 = vunpack.c.h.b16 %v627
    %v764 = vunpack.c.l.b16 %v628
    %v765 = vunpack.c.h.b16 %v628
    %v766 = vunpack.c.l.b16 %v629
    %v767 = vunpack.c.h.b16 %v629
    %v768 = vunpack.c.l.b16 %v630
    %v769 = vunpack.c.h.b16 %v630
    %v770 = vunpack.c.l.b16 %v631
    %v771 = vunpack.c.h.b16 %v631
    %v772 = vunpack.c.l.b16 %v632
    %v773 = vunpack.c.h.b16 %v632
    %v774 = vunpack.c.l.b16 %v633
    %v775 = vunpack.c.h.b16 %v633
    %v776 = vunpack.c.l.b16 %v634
    %v777 = vunpack.c.h.b16 %v634
    %v778 = vunpack.c.l.b16 %v635
    %v779 = vunpack.c.h.b16 %v635
    %v780 = vunpack.c.l.b16 %v636
    %v781 = vunpack.c.h.b16 %v636
    %v782 = vunpack.c.l.b16 %v637
    %v783 = vunpack.c.h.b16 %v637
    %v784 = vunpack.c.l.b16 %v638
    %v785 = vunpack.c.h.b16 %v638
    %v786 = vunpack.c.l.b16 %v639
    %v787 = vunpack.c.h.b16 %v639
    %v788 = vunpack.c.l.b16 %v640
    %v789 = vunpack.c.h.b16 %v640
    %v790 = vunpack.c.l.b16 %v641
    %v791 = vunpack.c.h.b16 %v641
    %v792 = vunpack.c.l.b16 %v642
    %v793 = vunpack.c.h.b16 %v642
    %v794 = vunpack.c.l.b16 %v643
    %v795 = vunpack.c.h.b16 %v643
    %v796 = vunpack.c.l.b16 %v644
    %v797 = vunpack.c.h.b16 %v644
    %v798 = vunpack.c.l.b16 %v645
    %v799 = vunpack.c.h.b16 %v645
    %v800 = vunpack.c.l.b16 %v646
    %v801 = vunpack.c.h.b16 %v646
    %v802 = vunpack.c.l.b16 %v647
    %v803 = vunpack.c.h.b16 %v647
    %v804 = vunpack.c.l.b16 %v648
    %v805 = vunpack.c.h.b16 %v648
    %v806 = vunpack.c.l.b16 %v649
    %v807 = vunpack.c.h.b16 %v649
    %v808 = vunpack.c.l.b16 %v650
    %v809 = vunpack.c.h.b16 %v650
    %v810 = vunpack.c.l.b16 %v651
    %v811 = vunpack.c.h.b16 %v651
    %v812 = vunpack.c.l.b16 %v652
    %v813 = vunpack.c.h.b16 %v652
    %v814 = vunpack.c.l.b16 %v653
    %v815 = vunpack.c.h.b16 %v653
    %v816 = vunpack.c.l.b16 %v654
    %v817 = vunpack.c.h.b16 %v654
    %v818 = vunpack.c.l.b16 %v655
    %v819 = vunpack.c.h.b16 %v655
    %v820 = vunpack.c.l.b16 %v656
    %v821 = vunpack.c.h.b16 %v656
    %v822 = vunpack.c.l.b16 %v657
    %v823 = vunpack.c.h.b16 %v657
    %v824 = vunpack.c.l.b16 %v658
    %v825 = vunpack.c.h.b16 %v658
    %v826 = vunpack.c.l.b16 %v659
    %v827 = vunpack.c.h.b16 %v659
    %v828 = vunpack.c.l.b16 %v660
    %v829 = vunpack.c.h.b16 %v660
    %v830 = vunpack.c.l.b16 %v661
    %v831 = vunpack.c.h.b16 %v661
    %v832 = vunpack.c.l.b16 %v662
    %v833 = vunpack.c.h.b16 %v662
    %v834 = vunpack.c.l.b16 %v663
    %v835 = vunpack.c.h.b16 %v663
    %v836 = vunpack.c.l.b16 %v664
    %v837 = vunpack.c.h.b16 %v664
    %v838 = vunpack.c.l.b16 %v665
    %v839 = vunpack.c.h.b16 %v665
    %v840 = vunpack.c.l.b16 %v666
    %v841 = vunpack.c.h.b16 %v666
    %v842 = vunpack.c.l.b16 %v667
    %v843 = vunpack.c.h.b16 %v667
    %v844 = vunpack.c.l.b16 %v668
    %v845 = vunpack.c.h.b16 %v668
    %v846 = vunpack.c.l.b16 %v669
    %v847 = vunpack.c.h.b16 %v669
    %v848 = vunpack.c.l.b16 %v670
    %v849 = vunpack.c.h.b16 %v670
    %v850 = vunpack.c.l.b16 %v671
    %v851 = vunpack.c.h.b16 %v671
    %v852 = vunpack.c.l.b16 %v672
    %v853 = vunpack.c.h.b16 %v672
    %v854 = vunpack.c.l.b16 %v673
    %v855 = vunpack.c.h.b16 %v673
    %v856 = vunpack.c.l.b16 %v674
    %v857 = vunpack.c.h.b16 %v674
    %v858 = vunpack.c.l.b16 %v675
    %v859 = vunpack.c.h.b16 %v675
    %v860 = vunpack.c.l.b16 %v676
    %v861 = vunpack.c.h.b16 %v676
    %v862 = vunpack.c.l.b16 %v677
    %v863 = vunpack.c.h.b16 %v677
    %v864 = vunpack.c.l.b16 %v678
    %v865 = vunpack.c.h.b16 %v678
    %v866 = vunpack.c.l.b16 %v679
    %v867 = vunpack.c.h.b16 %v679
    %v868 = vunpack.c.l.b16 %v680
    %v869 = vunpack.c.h.b16 %v680
    %v870 = vunpack.c.l.b16 %v681
    %v871 = vunpack.c.h.b16 %v681
    %v872 = vunpack.c.l.b16 %v682
    %v873 = vunpack.c.h.b16 %v682
    %v874 = vunpack.c.l.b16 %v683
    %v875 = vunpack.c.h.b16 %v683
    %v876 = vpack.c.b16 %v750, %v748
    %v877 = vpack.c.b16 %v751, %v749
    %v878 = vpack.c.b16 %v754, %v752
    %v879 = vpack.c.b16 %v755, %v753
    %v880 = vpack.c.b16 %v758, %v756
    %v881 = vpack.c.b16 %v759, %v757
    %v882 = vpack.c.b16 %v762, %v760
    %v883 = vpack.c.b16 %v763, %v761
    %v884 = vpack.c.b16 %v766, %v764
    %v885 = vpack.c.b16 %v767, %v765
    %v886 = vpack.c.b16 %v770, %v768
    %v887 = vpack.c.b16 %v771, %v769
    %v888 = vpack.c.b16 %v774, %v772
    %v889 = vpack.c.b16 %v775, %v773
    %v890 = vpack.c.b16 %v778, %v776
    %v891 = vpack.c.b16 %v779, %v777
    %v892 = vpack.c.b16 %v782, %v780
    %v893 = vpack.c.b16 %v783, %v781
    %v894 = vpack.c.b16 %v786, %v784
    %v895 = vpack.c.b16 %v787, %v785
    %v896 = vpack.c.b16 %v790, %v788
    %v897 = vpack.c.b16 %v791, %v789
    %v898 = vpack.c.b16 %v794, %v792
    %v899 = vpack.c.b16 %v795, %v793
    %v900 = vpack.c.b16 %v798, %v796
    %v901 = vpack.c.b16 %v799, %v797
    %v902 = vpack.c.b16 %v802, %v800
    %v903 = vpack.c.b16 %v803, %v801
    %v904 = vpack.c.b16 %v806, %v804
    %v905 = vpack.c.b16 %v807, %v805
    %v906 = vpack.c.b16 %v810, %v808
    %v907 = vpack.c.b16 %v811, %v809
    %v908 = vpack.c.b16 %v814, %v812
    %v909 = vpack.c.b16 %v815, %v813
    %v910 = vpack.c.b16 %v818, %v816
    %v911 = vpack.c.b16 %v819, %v817
    %v912 = vpack.c.b16 %v822, %v820
    %v913 = vpack.c.b16 %v823, %v821
    %v914 = vpack.c.b16 %v826, %v824
    %v915 = vpack.c.b16 %v827, %v825
    %v916 = vpack.c.b16 %v830, %v828
    %v917 = vpack.c.b16 %v831, %v829
    %v918 = vpack.c.b16 %v834, %v832
    %v919 = vpack.c.b16 %v835, %v833
    %v920 = vpack.c.b16 %v838, %v836
    %v921 = vpack.c.b16 %v839, %v837
    %v922 = vpack.c.b16 %v842, %v840
    %v923 = vpack.c.b16 %v843, %v841
    %v924 = vpack.c.b16 %v846, %v844
    %v925 = vpack.c.b16 %v847, %v845
    %v926 = vpack.c.b16 %v850, %v848
    %v927 = vpack.c.b16 %v851, %v849
    %v928 = vpack.c.b16 %v854, %v852
    %v929 = vpack.c.b16 %v855, %v853
    %v930 = vpack.c.b16 %v858, %v856
    %v931 = vpack.c.b16 %v859, %v857
    %v932 = vpack.c.b16 %v862, %v860
    %v933 = vpack.c.b16 %v863, %v861
    %v934 = vpack.c.b16 %v866, %v864
    %v935 = vpack.c.b16 %v867, %v865
    %v936 = vpack.c.b16 %v870, %v868
    %v937 = vpack.c.b16 %v871, %v869
    %v938 = vpack.c.b16 %v874, %v872
    %v939 = vpack.c.b16 %v875, %v873
    %1004 = vmatpush.bf16.msra.mxu0 %v890
    %1005 = vmatpush.bf16.msra.mxu0 %v888
    %1006 = vmatpush.bf16.msra.mxu0 %v886
    %1007 = vmatpush.bf16.msra.mxu0 %v884
    %1008 = vmatpush.bf16.msra.mxu0 %v882
    %1009 = vmatpush.bf16.msra.mxu0 %v880
    %1010 = vmatpush.bf16.msra.mxu0 %v878
    %1011 = vmatpush.bf16.msra.mxu0 %v876
    %1012 = vmatmul.bf16.gmra.mxu0 %v616
    %v1013 = vpop.f32.mrf.mxu0
    %v1014 = vadd.f32 0.0, %v1013
    %v1015 = vpop.f32.mrf.mxu0
    %1016 = vdwg.mxu0
    %1017 = vmatpush.bf16.msra.mxu0 %v906
    %1018 = vmatpush.bf16.msra.mxu0 %v904
    %1019 = vmatpush.bf16.msra.mxu0 %v902
    %1020 = vmatpush.bf16.msra.mxu0 %v900
    %1021 = vmatpush.bf16.msra.mxu0 %v898
    %1022 = vmatpush.bf16.msra.mxu0 %v896
    %1023 = vmatpush.bf16.msra.mxu0 %v894
    %1024 = vmatpush.bf16.msra.mxu0 %v892
    %1025 = vmatmul.bf16.gmra.mxu0 %v617
    %v1026 = vpop.f32.mrf.mxu0
    %v1027 = vadd.f32 %v1014, %v1026
    %v1028 = vpop.f32.mrf.mxu0
    %1029 = vdwg.mxu0
    %1030 = vmatpush.bf16.msra.mxu0 %v922
    %1031 = vmatpush.bf16.msra.mxu0 %v920
    %1032 = vmatpush.bf16.msra.mxu0 %v918
    %1033 = vmatpush.bf16.msra.mxu0 %v916
    %1034 = vmatpush.bf16.msra.mxu0 %v914
    %1035 = vmatpush.bf16.msra.mxu0 %v912
    %1036 = vmatpush.bf16.msra.mxu0 %v910
    %1037 = vmatpush.bf16.msra.mxu0 %v908
    %1038 = vmatmul.bf16.gmra.mxu0 %v618
    %v1039 = vpop.f32.mrf.mxu0
    %v1040 = vadd.f32 %v1027, %v1039
    %v1041 = vpop.f32.mrf.mxu0
    %1042 = vdwg.mxu0
    %1043 = vmatpush.bf16.msra.mxu0 %v938
    %1044 = vmatpush.bf16.msra.mxu0 %v936
    %1045 = vmatpush.bf16.msra.mxu0 %v934
    %1046 = vmatpush.bf16.msra.mxu0 %v932
    %1047 = vmatpush.bf16.msra.mxu0 %v930
    %1048 = vmatpush.bf16.msra.mxu0 %v928
    %1049 = vmatpush.bf16.msra.mxu0 %v926
    %1050 = vmatpush.bf16.msra.mxu0 %v924
    %1051 = vmatmul.bf16.gmra.mxu0 %v619
    %v1052 = vpop.f32.mrf.mxu0
    %v1053 = vadd.f32 %v1040, %v1052
    %v1054 = vpop.f32.mrf.mxu0
    %1055 = vdwg.mxu0
    %1056 = vmatpush.bf16.msra.mxu0 %v891
    %1057 = vmatpush.bf16.msra.mxu0 %v889
    %1058 = vmatpush.bf16.msra.mxu0 %v887
    %1059 = vmatpush.bf16.msra.mxu0 %v885
    %1060 = vmatpush.bf16.msra.mxu0 %v883
    %1061 = vmatpush.bf16.msra.mxu0 %v881
    %1062 = vmatpush.bf16.msra.mxu0 %v879
    %1063 = vmatpush.bf16.msra.mxu0 %v877
    %1064 = vmatmul.bf16.gmra.mxu0 %v616
    %v1065 = vpop.f32.mrf.mxu0
    %v1066 = vadd.f32 0.0, %v1065
    %v1067 = vpop.f32.mrf.mxu0
    %1068 = vdwg.mxu0
    %1069 = vmatpush.bf16.msra.mxu0 %v907
    %1070 = vmatpush.bf16.msra.mxu0 %v905
    %1071 = vmatpush.bf16.msra.mxu0 %v903
    %1072 = vmatpush.bf16.msra.mxu0 %v901
    %1073 = vmatpush.bf16.msra.mxu0 %v899
    %1074 = vmatpush.bf16.msra.mxu0 %v897
    %1075 = vmatpush.bf16.msra.mxu0 %v895
    %1076 = vmatpush.bf16.msra.mxu0 %v893
    %1077 = vmatmul.bf16.gmra.mxu0 %v617
    %v1078 = vpop.f32.mrf.mxu0
    %v1079 = vadd.f32 %v1066, %v1078
    %v1080 = vpop.f32.mrf.mxu0
    %1081 = vdwg.mxu0
    %1082 = vmatpush.bf16.msra.mxu0 %v923
    %1083 = vmatpush.bf16.msra.mxu0 %v921
    %1084 = vmatpush.bf16.msra.mxu0 %v919
    %1085 = vmatpush.bf16.msra.mxu0 %v917
    %1086 = vmatpush.bf16.msra.mxu0 %v915
    %1087 = vmatpush.bf16.msra.mxu0 %v913
    %1088 = vmatpush.bf16.msra.mxu0 %v911
    %1089 = vmatpush.bf16.msra.mxu0 %v909
    %1090 = vmatmul.bf16.gmra.mxu0 %v618
    %v1091 = vpop.f32.mrf.mxu0
    %v1092 = vadd.f32 %v1079, %v1091
    %v1093 = vpop.f32.mrf.mxu0
    %1094 = vdwg.mxu0
    %1095 = vmatpush.bf16.msra.mxu0 %v939
    %1096 = vmatpush.bf16.msra.mxu0 %v937
    %1097 = vmatpush.bf16.msra.mxu0 %v935
    %1098 = vmatpush.bf16.msra.mxu0 %v933
    %1099 = vmatpush.bf16.msra.mxu0 %v931
    %1100 = vmatpush.bf16.msra.mxu0 %v929
    %1101 = vmatpush.bf16.msra.mxu0 %v927
    %1102 = vmatpush.bf16.msra.mxu0 %v925
    %1103 = vmatmul.bf16.gmra.mxu0 %v619
    %v1104 = vpop.f32.mrf.mxu0
    %v1105 = vadd.f32 %v1092, %v1104
    %v1106 = vpop.f32.mrf.mxu0
    %1107 = vdwg.mxu0
    %p1108 = scmp.eq.s32.totalorder 0, 0
    // Predicated region
    $region54: #{txtnet_t_forward.1} parent=1 // pred_check
      %p1109 = pneg %p1108
    $region55: #{txtnet_t_forward.1} parent=1 // pred_check_branch
      %1111 = sbr.rel (%p1109) target = $region57
    $region56: #{txtnet_t_forward.1} parent=1 // pred_region
      %1112 = vst [vmem:[#allocation2] sm:$0xff] %v1053
      %1113 = vst [vmem:[#allocation2 + $0x8] sm:$0xff] %v1105
    $region57: #{txtnet_t_forward.1} parent=1 // pred_fallthru
      _
    %p1114 = scmp.gt.s32.totalorder 0, 0
    // Predicated region
    $region58: #{txtnet_t_forward.1} parent=1 // pred_check
      %p1115 = pneg %p1114
    $region59: #{txtnet_t_forward.1} parent=1 // pred_check_branch
      %1117 = sbr.rel (%p1115) target = $region61
    $region60: #{txtnet_t_forward.1} parent=1 // pred_region
      %v1118 = vld [vmem:[#allocation2] sm:$0xff]
      %v1119 = vld [vmem:[#allocation2 + $0x8] sm:$0xff]
      %v1120 = vadd.f32 %v1118, %v1053
      %v1121 = vadd.f32 %v1119, %v1105
      %1122 = vst [vmem:[#allocation2] sm:$0xff] %v1120
      %1123 = vst [vmem:[#allocation2 + $0x8] sm:$0xff] %v1121
    $region61: #{txtnet_t_forward.1} parent=1 // pred_fallthru
      _
    // Predicated region
    $region62: #{txtnet_t_forward.1} parent=1 // pred_check
      %p1124 = pneg %p1108
    $region63: #{txtnet_t_forward.1} parent=1 // pred_check_branch
      %1126 = sbr.rel (%p1124) target = $region65
    $region64: #{txtnet_t_forward.1} parent=1 // pred_region
      %v1127 = vld [vmem:[#allocation2] sm:$0xff]
      %v1128 = vld [vmem:[#allocation2 + $0x8] sm:$0xff]
      %v1129 = vld [vmem:[%s4] sm:$0x3]
      %v1131 = vperm.slane %v1129, 0
      %v1132 = vperm.slane %v1129, 1
      %v1135 = vadd.f32 %v1127, %v1131
      %v1136 = vadd.f32 %v1128, %v1132
      %v1137 = vmax.f32 %v1135, 0.0
      %v1138 = vmax.f32 %v1136, 0.0
      %1139 = vst [vmem:[#allocation12] sm:$0xff] %v1137
      %1140 = vst [vmem:[#allocation12 + $0x8] sm:$0xff] %v1138
      %v1141 = vpack.c.bf16 %v1137, %v1137
      %v1142 = vpack.c.bf16 %v1138, %v1138
      %v1143 = vld [vmem:[#allocation8] sm:$0xf]
      %v1144 = vld [vmem:[#allocation8 + $0x4] sm:$0xf]
      %v1145 = vld [vmem:[#allocation8 + $0x8] sm:$0xf]
      %v1146 = vld [vmem:[#allocation8 + $0xc] sm:$0xf]
      %v1147 = vld [vmem:[#allocation8 + $0x10] sm:$0xf]
      %v1148 = vld [vmem:[#allocation8 + $0x14] sm:$0xf]
      %v1149 = vld [vmem:[#allocation8 + $0x18] sm:$0xf]
      %v1150 = vld [vmem:[#allocation8 + $0x1c] sm:$0xf]
      %v1151 = vld [vmem:[#allocation8 + $0x20] sm:$0xf]
      %v1152 = vld [vmem:[#allocation8 + $0x24] sm:$0xf]
      %v1153 = vld [vmem:[#allocation8 + $0x28] sm:$0xf]
      %v1154 = vld [vmem:[#allocation8 + $0x2c] sm:$0xf]
      %v1155 = vld [vmem:[#allocation8 + $0x30] sm:$0xf]
      %v1156 = vld [vmem:[#allocation8 + $0x34] sm:$0xf]
      %v1157 = vld [vmem:[#allocation8 + $0x38] sm:$0xf]
      %v1158 = vld [vmem:[#allocation8 + $0x3c] sm:$0xf]
      %v1159 = vld [vmem:[#allocation8 + $0x40] sm:$0xf]
      %v1160 = vld [vmem:[#allocation8 + $0x44] sm:$0xf]
      %v1161 = vld [vmem:[#allocation8 + $0x48] sm:$0xf]
      %v1162 = vld [vmem:[#allocation8 + $0x4c] sm:$0xf]
      %v1163 = vld [vmem:[#allocation8 + $0x50] sm:$0xf]
      %v1164 = vld [vmem:[#allocation8 + $0x54] sm:$0xf]
      %v1165 = vld [vmem:[#allocation8 + $0x58] sm:$0xf]
      %v1166 = vld [vmem:[#allocation8 + $0x5c] sm:$0xf]
      %v1167 = vld [vmem:[#allocation8 + $0x60] sm:$0xf]
      %v1168 = vld [vmem:[#allocation8 + $0x64] sm:$0xf]
      %v1169 = vld [vmem:[#allocation8 + $0x68] sm:$0xf]
      %v1170 = vld [vmem:[#allocation8 + $0x6c] sm:$0xf]
      %v1171 = vld [vmem:[#allocation8 + $0x70] sm:$0xf]
      %v1172 = vld [vmem:[#allocation8 + $0x74] sm:$0xf]
      %v1173 = vld [vmem:[#allocation8 + $0x78] sm:$0xf]
      %v1174 = vld [vmem:[#allocation8 + $0x7c] sm:$0xf]
      %v1175 = vld [vmem:[%s6] sm:$0x1]
      %v1177 = vperm.slane %v1175, 0
      %v1211 = vunpack.c.l.b16 %v1143
      %v1212 = vunpack.c.l.b16 %v1144
      %v1213 = vunpack.c.l.b16 %v1145
      %v1214 = vunpack.c.l.b16 %v1146
      %v1215 = vunpack.c.l.b16 %v1147
      %v1216 = vunpack.c.l.b16 %v1148
      %v1217 = vunpack.c.l.b16 %v1149
      %v1218 = vunpack.c.l.b16 %v1150
      %v1219 = vunpack.c.l.b16 %v1151
      %v1220 = vunpack.c.l.b16 %v1152
      %v1221 = vunpack.c.l.b16 %v1153
      %v1222 = vunpack.c.l.b16 %v1154
      %v1223 = vunpack.c.l.b16 %v1155
      %v1224 = vunpack.c.l.b16 %v1156
      %v1225 = vunpack.c.l.b16 %v1157
      %v1226 = vunpack.c.l.b16 %v1158
      %v1227 = vunpack.c.l.b16 %v1159
      %v1228 = vunpack.c.l.b16 %v1160
      %v1229 = vunpack.c.l.b16 %v1161
      %v1230 = vunpack.c.l.b16 %v1162
      %v1231 = vunpack.c.l.b16 %v1163
      %v1232 = vunpack.c.l.b16 %v1164
      %v1233 = vunpack.c.l.b16 %v1165
      %v1234 = vunpack.c.l.b16 %v1166
      %v1235 = vunpack.c.l.b16 %v1167
      %v1236 = vunpack.c.l.b16 %v1168
      %v1237 = vunpack.c.l.b16 %v1169
      %v1238 = vunpack.c.l.b16 %v1170
      %v1239 = vunpack.c.l.b16 %v1171
      %v1240 = vunpack.c.l.b16 %v1172
      %v1241 = vunpack.c.l.b16 %v1173
      %v1242 = vunpack.c.l.b16 %v1174
      %v1243 = vpack.c.b16 %v1212, %v1211
      %v1244 = vpack.c.b16 %v1214, %v1213
      %v1245 = vpack.c.b16 %v1216, %v1215
      %v1246 = vpack.c.b16 %v1218, %v1217
      %v1247 = vpack.c.b16 %v1220, %v1219
      %v1248 = vpack.c.b16 %v1222, %v1221
      %v1249 = vpack.c.b16 %v1224, %v1223
      %v1250 = vpack.c.b16 %v1226, %v1225
      %v1251 = vpack.c.b16 %v1228, %v1227
      %v1252 = vpack.c.b16 %v1230, %v1229
      %v1253 = vpack.c.b16 %v1232, %v1231
      %v1254 = vpack.c.b16 %v1234, %v1233
      %v1255 = vpack.c.b16 %v1236, %v1235
      %v1256 = vpack.c.b16 %v1238, %v1237
      %v1257 = vpack.c.b16 %v1240, %v1239
      %v1258 = vpack.c.b16 %v1242, %v1241
      %1275 = vmatpush.bf16.msra.mxu0 %v1250
      %1276 = vmatpush.bf16.msra.mxu0 %v1249
      %1277 = vmatpush.bf16.msra.mxu0 %v1248
      %1278 = vmatpush.bf16.msra.mxu0 %v1247
      %1279 = vmatpush.bf16.msra.mxu0 %v1246
      %1280 = vmatpush.bf16.msra.mxu0 %v1245
      %1281 = vmatpush.bf16.msra.mxu0 %v1244
      %1282 = vmatpush.bf16.msra.mxu0 %v1243
      %1283 = vmatmul.bf16.gmra.mxu0 %v1141
      %v1284 = vpop.f32.mrf.mxu0
      %v1285 = vadd.f32 %v1177, %v1284
      %v1286 = vpop.f32.mrf.mxu0
      %1287 = vdwg.mxu0
      %1288 = vmatpush.bf16.msra.mxu0 %v1258
      %1289 = vmatpush.bf16.msra.mxu0 %v1257
      %1290 = vmatpush.bf16.msra.mxu0 %v1256
      %1291 = vmatpush.bf16.msra.mxu0 %v1255
      %1292 = vmatpush.bf16.msra.mxu0 %v1254
      %1293 = vmatpush.bf16.msra.mxu0 %v1253
      %1294 = vmatpush.bf16.msra.mxu0 %v1252
      %1295 = vmatpush.bf16.msra.mxu0 %v1251
      %1296 = vmatmul.bf16.gmra.mxu0 %v1142
      %v1297 = vpop.f32.mrf.mxu0
      %v1298 = vadd.f32 %v1285, %v1297
      %v1299 = vpop.f32.mrf.mxu0
      %1300 = vdwg.mxu0
      %v1301 = vmax.f32 %v1298, 0.0
      %1302 = vst [vmem:[#allocation14] sm:$0xff] %v1301
      %v1303 = vpack.c.bf16 %v1301, %v1301
      %v1304 = vld [vmem:[#allocation9] sm:$0xf]
      %v1305 = vld [vmem:[#allocation9 + $0x4] sm:$0xf]
      %v1306 = vld [vmem:[#allocation9 + $0x8] sm:$0xf]
      %v1307 = vld [vmem:[#allocation9 + $0xc] sm:$0xf]
      %v1308 = vld [vmem:[#allocation9 + $0x10] sm:$0xf]
      %v1309 = vld [vmem:[#allocation9 + $0x14] sm:$0xf]
      %v1310 = vld [vmem:[#allocation9 + $0x18] sm:$0xf]
      %v1311 = vld [vmem:[#allocation9 + $0x1c] sm:$0xf]
      %v1312 = vld [vmem:[#allocation9 + $0x20] sm:$0xf]
      %v1313 = vld [vmem:[#allocation9 + $0x24] sm:$0xf]
      %v1314 = vld [vmem:[#allocation9 + $0x28] sm:$0xf]
      %v1315 = vld [vmem:[#allocation9 + $0x2c] sm:$0xf]
      %v1316 = vld [vmem:[#allocation9 + $0x30] sm:$0xf]
      %v1317 = vld [vmem:[#allocation9 + $0x34] sm:$0xf]
      %v1318 = vld [vmem:[#allocation9 + $0x38] sm:$0xf]
      %v1319 = vld [vmem:[#allocation9 + $0x3c] sm:$0xf]
      %v1320 = vld [vmem:[%s8] sm:$0x1]
      %v1322 = vperm.slane %v1320, 0
      %v1340 = vunpack.c.l.b16 %v1304
      %v1341 = vunpack.c.l.b16 %v1305
      %v1342 = vunpack.c.l.b16 %v1306
      %v1343 = vunpack.c.l.b16 %v1307
      %v1344 = vunpack.c.l.b16 %v1308
      %v1345 = vunpack.c.l.b16 %v1309
      %v1346 = vunpack.c.l.b16 %v1310
      %v1347 = vunpack.c.l.b16 %v1311
      %v1348 = vunpack.c.l.b16 %v1312
      %v1349 = vunpack.c.l.b16 %v1313
      %v1350 = vunpack.c.l.b16 %v1314
      %v1351 = vunpack.c.l.b16 %v1315
      %v1352 = vunpack.c.l.b16 %v1316
      %v1353 = vunpack.c.l.b16 %v1317
      %v1354 = vunpack.c.l.b16 %v1318
      %v1355 = vunpack.c.l.b16 %v1319
      %v1356 = vpack.c.b16 %v1341, %v1340
      %v1357 = vpack.c.b16 %v1343, %v1342
      %v1358 = vpack.c.b16 %v1345, %v1344
      %v1359 = vpack.c.b16 %v1347, %v1346
      %v1360 = vpack.c.b16 %v1349, %v1348
      %v1361 = vpack.c.b16 %v1351, %v1350
      %v1362 = vpack.c.b16 %v1353, %v1352
      %v1363 = vpack.c.b16 %v1355, %v1354
      %1372 = vmatpush.bf16.msra.mxu0 %v1363
      %1373 = vmatpush.bf16.msra.mxu0 %v1362
      %1374 = vmatpush.bf16.msra.mxu0 %v1361
      %1375 = vmatpush.bf16.msra.mxu0 %v1360
      %1376 = vmatpush.bf16.msra.mxu0 %v1359
      %1377 = vmatpush.bf16.msra.mxu0 %v1358
      %1378 = vmatpush.bf16.msra.mxu0 %v1357
      %1379 = vmatpush.bf16.msra.mxu0 %v1356
      %1380 = vmatmul.bf16.gmra.mxu0 %v1303
      %v1381 = vpop.f32.mrf.mxu0
      %v1382 = vadd.f32 %v1322, %v1381
      %v1383 = vpop.f32.mrf.mxu0
      %1384 = vdwg.mxu0
      %v1385 = vtanh.pop %v1382
      %1386 = vst [vmem:[#allocation15] sm:$0xff] %v1385
    $region65: #{txtnet_t_forward.1} parent=1 // pred_fallthru
      _
    // Predicated region
    $region66: #{txtnet_t_forward.1} parent=1 // pred_check
      _
    $region67: #{txtnet_t_forward.1} parent=1 // pred_check_branch
      %1388 = sbr.rel (0) target = $region69
    $region68: #{txtnet_t_forward.1} parent=1 // pred_region
      %1390 = vsyncadd [#allocation5], 0
      %s1392 = sshll.u32 [#allocation11], 4
      %s1393 = int_to_ptr.vmem [resolvable:$true] %s1392
      %s1394 = sshll.u32 %s9, 4
      %s1395 = int_to_ptr.hbm [resolvable:$true] %s1394
      %1397 = dma.vmem_to_hbm [thread:$0]  %s1393, 512, %s1395, [#allocation5]
    $region69: #{txtnet_t_forward.1} parent=1 // pred_fallthru
      _
    // Predicated region
    $region70: #{txtnet_t_forward.1} parent=1 // pred_check
      _
    $region71: #{txtnet_t_forward.1} parent=1 // pred_check_branch
      %1399 = sbr.rel (0) target = $region73
    $region72: #{txtnet_t_forward.1} parent=1 // pred_region
      %1401 = vsyncadd [#allocation13], 0
      %s1403 = sshll.u32 [#allocation12], 4
      %s1404 = int_to_ptr.vmem [resolvable:$true] %s1403
      %s1405 = sshll.u32 %s10, 4
      %s1406 = int_to_ptr.hbm [resolvable:$true] %s1405
      %1408 = dma.vmem_to_hbm [thread:$0]  %s1404, 256, %s1406, [#allocation13]
    $region73: #{txtnet_t_forward.1} parent=1 // pred_fallthru
      _
    // Predicated region
    $region74: #{txtnet_t_forward.1} parent=1 // pred_check
      _
    $region75: #{txtnet_t_forward.1} parent=1 // pred_check_branch
      %1410 = sbr.rel (0) target = $region77
    $region76: #{txtnet_t_forward.1} parent=1 // pred_region
      %1412 = vsyncadd [#allocation13], 0
      %s1414 = sshll.u32 [#allocation14], 4
      %s1415 = int_to_ptr.vmem [resolvable:$true] %s1414
      %s1416 = sshll.u32 %s11, 4
      %s1417 = int_to_ptr.hbm [resolvable:$true] %s1416
      %1419 = dma.vmem_to_hbm [thread:$0]  %s1415, 128, %s1417, [#allocation13]
    $region77: #{txtnet_t_forward.1} parent=1 // pred_fallthru
      _
    // Predicated region
    $region78: #{txtnet_t_forward.1} parent=1 // pred_check
      _
    $region79: #{txtnet_t_forward.1} parent=1 // pred_check_branch
      %1421 = sbr.rel (0) target = $region81
    $region80: #{txtnet_t_forward.1} parent=1 // pred_region
      %1423 = vsyncadd [#allocation16], 0
      %s1425 = sshll.u32 [#allocation15], 4
      %s1426 = int_to_ptr.vmem [resolvable:$true] %s1425
      %s1427 = sshll.u32 %s12, 4
      %s1428 = int_to_ptr.hbm [resolvable:$true] %s1427
      %1430 = dma.vmem_to_hbm [thread:$0]  %s1426, 128, %s1428, [#allocation16]
    $region81: #{txtnet_t_forward.1} parent=1 // pred_fallthru
      _
    // Predicated region
    $region82: #{txtnet_t_forward.1} parent=1 // pred_check
      _
    $region83: #{txtnet_t_forward.1} parent=1 // pred_check_branch
      %1432 = sbr.rel (0) target = $region85
    $region84: #{txtnet_t_forward.1} parent=1 // pred_region
      %1434 = dma.done [#allocation5], 512
    $region85: #{txtnet_t_forward.1} parent=1 // pred_fallthru
      _
    // Predicated region
    $region86: #{txtnet_t_forward.1} parent=1 // pred_check
      _
    $region87: #{txtnet_t_forward.1} parent=1 // pred_check_branch
      %1436 = sbr.rel (0) target = $region89
    $region88: #{txtnet_t_forward.1} parent=1 // pred_region
      %1438 = dma.done [#allocation13], 256
    $region89: #{txtnet_t_forward.1} parent=1 // pred_fallthru
      _
    // Predicated region
    $region90: #{txtnet_t_forward.1} parent=1 // pred_check
      _
    $region91: #{txtnet_t_forward.1} parent=1 // pred_check_branch
      %1440 = sbr.rel (0) target = $region93
    $region92: #{txtnet_t_forward.1} parent=1 // pred_region
      %1442 = dma.done [#allocation13], 128
    $region93: #{txtnet_t_forward.1} parent=1 // pred_fallthru
      _
    // Predicated region
    $region94: #{txtnet_t_forward.1} parent=1 // pred_check
      _
    $region95: #{txtnet_t_forward.1} parent=1 // pred_check_branch
      %1444 = sbr.rel (0) target = $region97
    $region96: #{txtnet_t_forward.1} parent=1 // pred_region
      %1446 = dma.done [#allocation16], 128
    $region97: #{txtnet_t_forward.1} parent=1 // pred_fallthru
      _
    %1447 = vsyncpa [#allocation4], 1
    %1448 = vsyncpa [#allocation7], 1
    %1449 = vsyncpa [#allocation10], 1
    %1450 = vsyncpa [#allocation5], 1
    %1451 = vsyncpa [#allocation13], 1
    %1452 = vsyncpa [#allocation16], 1

</llo_original>
